<compile_context>
chip_gen: v6e
topology: v6e:2x2x1
jax: 0.10.0
libtpu: 0.0.40
codegen_flags: <defaults>
</compile_context>

<pallas_src>
import functools

import jax
import jax.numpy as jnp
from jax import lax
from jax.experimental import pallas as pl
from jax.experimental.pallas import tpu as pltpu

BN_EPS = 1e-5
LANE = 128


def _round_up(x, m):
    return (x + m - 1) // m * m


def _vmem_limit_bytes():
    """~3/4 of physical VMEM, capped at 96 MiB (v7x only has 64 MiB)."""
    try:
        phys = pltpu.get_tpu_info().vmem_capacity_bytes
    except Exception:
        phys = 64 * 1024 * 1024  # conservative (v7x) fallback
    return int(min(phys * 3 // 4, 96 * 1024 * 1024))


# ---------------------------------------------------------------------------
# Fused-im2col convolution of one padded NHWC image tile (shared by both passes)
# ---------------------------------------------------------------------------
def _conv_tile(x_img, w_ref, *, ho, wo, stride, kh, kw, cin, cp):
    """x_img: (hp, wp, cin) bf16 value; w_ref: (kh*kw, cin, cp) bf16 ref.

    Returns the (ho*wo, cp) f32 convolution (bias-free) of the image tile as
    KH*KW shifted-slice matmuls; `wo` is already padded to a multiple of 16 so
    the (ho, wo, cin) -> (ho*wo, cin) collapse is tile-aligned.
    """
    h_span = (ho - 1) * stride + 1
    w_span = (wo - 1) * stride + 1
    acc = jnp.zeros((ho * wo, cp), jnp.float32)
    for i in range(kh):
        for j in range(kw):
            xs = x_img[i:i + h_span:stride, j:j + w_span:stride, :]  # (ho,wo,cin)
            lhs = xs.reshape(ho * wo, cin)
            acc = acc + jnp.dot(lhs, w_ref[i * kw + j],
                                preferred_element_type=jnp.float32)
    return acc


# ---------------- Pass 1: per-image channel sum / sum-of-squares ------------
def conv_stats_kernel(x_ref, w_ref, stats_ref, *, ho, wo, stride, kh, kw, cin, cp):
    conv = _conv_tile(x_ref[0], w_ref, ho=ho, wo=wo, stride=stride,
                      kh=kh, kw=kw, cin=cin, cp=cp)
    s = jnp.sum(conv, axis=0, keepdims=True)            # (1, cp)
    ss = jnp.sum(conv * conv, axis=0, keepdims=True)    # (1, cp)
    # Single sublane-aligned (8, cp) store: row 0 = sum, row 1 = sumsq.
    stats_ref[0] = jnp.concatenate(
        [s, ss, jnp.zeros((6, cp), jnp.float32)], axis=0)


# ---------------- Pass 2: recomputed conv + fused BN scale/shift + SiLU -----
def conv_bn_silu_kernel(x_ref, w_ref, scale_ref, shift_ref, o_ref, *,
                        ho, wo, stride, kh, kw, cin, cp):
    conv = _conv_tile(x_ref[0], w_ref, ho=ho, wo=wo, stride=stride,
                      kh=kh, kw=kw, cin=cin, cp=cp)
    y = conv * scale_ref[...] + shift_ref[...]           # one FMA per element
    o_ref[0] = (y * jax.nn.sigmoid(y)).astype(o_ref.dtype)


# ---------------------------------------------------------------------------
# Wrapper
# ---------------------------------------------------------------------------
def conv_block(x_nchw, weight, bias, gamma, beta, *, stride, padding):
    """Forward of ConvBlock. x_nchw: (N,Cin,H,W); weight: (Cout,Cin,KH,KW).

    `bias` is accepted for API parity but a per-channel constant added before
    training-mode BatchNorm is exactly cancelled by the mean subtraction, so it
    is folded away.  (Invalid for eval-mode BN / running-stat side effects.)
    """
    del bias
    n, cin, h, w = x_nchw.shape
    cout, cin_w, kh, kw = weight.shape
    assert cin == cin_w

    ho = (h + 2 * padding - kh) // stride + 1
    wo = (w + 2 * padding - kw) // stride + 1
    # Pad Wo so the in-kernel collapse is tile-aligned (extra cols are exact 0).
    wo_pad = _round_up(wo, 16)
    hp = (ho - 1) * stride + kh
    wp = (wo_pad - 1) * stride + kw
    cp = _round_up(cout, LANE)                 # lane-dense output channels
    m_img = ho * wo                            # true rows per image
    m_total = n * m_img
    m_pad_img = ho * wo_pad                    # rows actually computed per image

    # One cheap cast + spatial zero-pad of the raw NHWC activation
    # (no KH*KW-amplified patch matrix is ever materialized).
    x_nhwc = jnp.transpose(x_nchw, (0, 2, 3, 1)).astype(jnp.bfloat16)
    x_pad = jnp.pad(x_nhwc, ((0, 0),
                             (padding, max(0, hp - h - padding)),
                             (padding, max(0, wp - w - padding)),
                             (0, 0)))[:, :hp, :wp, :]

    # (Cout,Cin,KH,KW) -> (KH*KW, Cin, Cp), zero-padded channels (resident,
    # constant index_map in both passes).
    w_mat = jnp.transpose(weight, (2, 3, 1, 0)).reshape(kh * kw, cin, cout)
    w_bf16 = jnp.zeros((kh * kw, cin, cp), jnp.bfloat16).at[:, :, :cout].set(
        w_mat.astype(jnp.bfloat16))

    vmem_limit = _vmem_limit_bytes()
    kern_kwargs = dict(ho=ho, wo=wo_pad, stride=stride, kh=kh, kw=kw,
                       cin=cin, cp=cp)

    conv_flops = 2 * n * m_pad_img * kh * kw * cin * cp
    x_bytes = int(x_pad.size) * 2
    w_bytes = int(w_bf16.size) * 2
    out_bytes = n * m_pad_img * cp * 4

    # ---- Pass 1: per-image channel sums (parallel over batch -> megacore) --
    stats = pl.pallas_call(
        functools.partial(conv_stats_kernel, **kern_kwargs),
        out_shape=jax.ShapeDtypeStruct((n, 8, cp), jnp.float32),
        grid=(n,),
        in_specs=[
            pl.BlockSpec((1, hp, wp, cin), lambda b: (b, 0, 0, 0)),
            pl.BlockSpec((kh * kw, cin, cp), lambda b: (0, 0, 0)),
        ],
        out_specs=pl.BlockSpec((1, 8, cp), lambda b: (b, 0, 0)),
        compiler_params=pltpu.CompilerParams(
            dimension_semantics=("parallel",),
            vmem_limit_bytes=vmem_limit),
        cost_estimate=pl.CostEstimate(
            flops=conv_flops + 3 * n * m_pad_img * cp,
            transcendentals=0,
            bytes_accessed=x_bytes + w_bytes + n * 8 * cp * 4),
    )(x_pad, w_bf16)

    # ---- Fold BN into per-channel scale/shift (tiny vectors, f32) ----------
    # Chan parallel-variance combination of the per-image partials.
    sum_b = stats[:, 0, :]                                   # (N, Cp)
    sumsq_b = stats[:, 1, :]                                 # (N, Cp)
    mean_b = sum_b / m_img
    ss_b = jnp.maximum(sumsq_b - m_img * mean_b * mean_b, 0.0)
    mean = jnp.mean(mean_b, axis=0)                          # equal counts
    var = (jnp.sum(ss_b, axis=0)
           + m_img * jnp.sum((mean_b - mean) ** 2, axis=0)) / m_total
    var = jnp.maximum(var, 0.0)                              # biased var (train BN)

    gamma_p = jnp.zeros((cp,), jnp.float32).at[:cout].set(gamma.astype(jnp.float32))
    beta_p = jnp.zeros((cp,), jnp.float32).at[:cout].set(beta.astype(jnp.float32))
    scale = gamma_p * lax.rsqrt(var + BN_EPS)
    shift = beta_p - mean * scale
    scale = scale.reshape(1, cp)
    shift = shift.reshape(1, cp)

    # ---- Pass 2: recomputed conv + BN + SiLU, streamed straight to HBM -----
    out_flat = pl.pallas_call(
        functools.partial(conv_bn_silu_kernel, **kern_kwargs),
        out_shape=jax.ShapeDtypeStruct((n, m_pad_img, cp), jnp.float32),
        grid=(n,),
        in_specs=[
            pl.BlockSpec((1, hp, wp, cin), lambda b: (b, 0, 0, 0)),
            pl.BlockSpec((kh * kw, cin, cp), lambda b: (0, 0, 0)),
            pl.BlockSpec((1, cp), lambda b: (0, 0)),
            pl.BlockSpec((1, cp), lambda b: (0, 0)),
        ],
        out_specs=pl.BlockSpec((1, m_pad_img, cp), lambda b: (b, 0, 0)),
        compiler_params=pltpu.CompilerParams(
            dimension_semantics=("parallel",),
            vmem_limit_bytes=vmem_limit),
        cost_estimate=pl.CostEstimate(
            flops=conv_flops + 8 * n * m_pad_img * cp,
            transcendentals=n * m_pad_img * cp,
            bytes_accessed=x_bytes + w_bytes + out_bytes + 2 * cp * 4),
    )(x_pad, w_bf16, scale, shift)

    out = out_flat[:, :, :cout].reshape(n, ho, wo_pad, cout)[:, :, :wo, :]
    return jnp.transpose(out, (0, 3, 1, 2))  # back to NCHW


def _reference(x_nchw, weight, bias, gamma, beta, *, stride, padding):
    """Plain-JAX reference (conv + BN(train) + SiLU) for validation."""
    conv = lax.conv_general_dilated(
        x_nchw, weight, window_strides=(stride, stride),
        padding=[(padding, padding), (padding, padding)],
        dimension_numbers=("NCHW", "OIHW", "NCHW"),
        precision=lax.Precision.HIGHEST)
    conv = conv + bias.reshape(1, -1, 1, 1)
    mean = jnp.mean(conv, axis=(0, 2, 3), keepdims=True)
    var = jnp.mean((conv - mean) ** 2, axis=(0, 2, 3), keepdims=True)
    xhat = (conv - mean) * lax.rsqrt(var + BN_EPS)
    y = xhat * gamma.reshape(1, -1, 1, 1) + beta.reshape(1, -1, 1, 1)
    return y * jax.nn.sigmoid(y)


if __name__ == "__main__":
    # Small, deterministic example consistent with ConvBlock(4, 8, 3, 1, 1).
    N, Cin, H, W = 2, 4, 16, 16
    Cout, K, STRIDE, PAD = 8, 3, 1, 1

    key = jax.random.PRNGKey(0)
    kx, kw_, kb, kg, kbt = jax.random.split(key, 5)
    x = jax.random.normal(kx, (N, Cin, H, W), dtype=jnp.float32)
    weight = jax.random.normal(kw_, (Cout, Cin, K, K), dtype=jnp.float32) * 0.1
    bias = jax.random.normal(kb, (Cout,), dtype=jnp.float32) * 0.1
    gamma = 1.0 + 0.1 * jax.random.normal(kg, (Cout,), dtype=jnp.float32)
    beta = 0.1 * jax.random.normal(kbt, (Cout,), dtype=jnp.float32)

    out = conv_block(x, weight, bias, gamma, beta, stride=STRIDE, padding=PAD)
    out = jax.block_until_ready(out)
    assert out.shape == (N, Cout, H, W), out.shape

    # Tight check against a reference using the same bf16-rounded MXU operands.
    x_bf = x.astype(jnp.bfloat16).astype(jnp.float32)
    w_bf = weight.astype(jnp.bfloat16).astype(jnp.float32)
    ref_bf = _reference(x_bf, w_bf, bias, gamma, beta, stride=STRIDE, padding=PAD)
    assert jnp.allclose(out, ref_bf, atol=2e-3, rtol=2e-3), \
        float(jnp.max(jnp.abs(out - ref_bf)))

    # Loose check against pure-f32 module semantics (bf16 operand rounding only).
    ref_f32 = _reference(x, weight, bias, gamma, beta, stride=STRIDE, padding=PAD)
    assert jnp.allclose(out, ref_f32, atol=2e-2, rtol=2e-2), \
        float(jnp.max(jnp.abs(out - ref_f32)))

    print("KERNEL_OK")
</pallas_src>

<mosaic_0001>
module attributes {stable_mosaic.version = 11 : i64} {
  func.func @conv_stats_kernel(%arg0: i32, %arg1: memref<1x18x18x4xbf16, #tpu.memory_space<vmem>>, %arg2: memref<9x4x128xbf16, #tpu.memory_space<vmem>>, %arg3: memref<1x8x128xf32, #tpu.memory_space<vmem>>) attributes {dimension_semantics = [#tpu.dimension_semantics<parallel>], iteration_bounds = array<i64: 2>, scalar_prefetch = 0 : i64, scratch_operands = 0 : i64, tpu.core_type = #tpu.core_type<tc>, window_params = [{transform_indices = @transform_0, window_bounds = array<i64: 1, 18, 18, 4>}, {pipeline_mode = #tpu.pipeline_mode<synchronous>, transform_indices = @transform_1, window_bounds = array<i64: 9, 4, 128>}, {transform_indices = @transform_2, window_bounds = array<i64: 1, 8, 128>}]} {
    %c0 = arith.constant 0 : index
    %c0_0 = arith.constant 0 : index
    %c0_1 = arith.constant 0 : index
    %c0_2 = arith.constant 0 : index
    %0 = vector.load %arg1[%c0, %c0_0, %c0_1, %c0_2] : memref<1x18x18x4xbf16, #tpu.memory_space<vmem>>, vector<1x18x18x4xbf16>
    %1 = vector.shape_cast %0 : vector<1x18x18x4xbf16> to vector<18x18x4xbf16>
    %cst = arith.constant 0.000000e+00 : f32
    %2 = vector.broadcast %cst : f32 to vector<256x128xf32>
    %3 = vector.extract_strided_slice %1 {offsets = [0, 0, 0], sizes = [16, 16, 4], strides = [1, 1, 1]} : vector<18x18x4xbf16> to vector<16x16x4xbf16>
    %4 = vector.shape_cast %3 : vector<16x16x4xbf16> to vector<256x4xbf16>
    %c0_3 = arith.constant 0 : index
    %c0_4 = arith.constant 0 : index
    %c0_5 = arith.constant 0 : index
    %5 = vector.load %arg2[%c0_3, %c0_4, %c0_5] : memref<9x4x128xbf16, #tpu.memory_space<vmem>>, vector<1x4x128xbf16>
    %6 = vector.shape_cast %5 : vector<1x4x128xbf16> to vector<4x128xbf16>
    %cst_6 = arith.constant dense<0.000000e+00> : vector<256x128xf32>
    %7 = tpu.matmul %4, %6, %cst_6 {dimension_numbers = #tpu.dot_dimension_numbers<[1], [0], [0], [1], [0, 0, 1, 1], [], []>} : vector<256x4xbf16>, vector<4x128xbf16>, vector<256x128xf32> -> vector<256x128xf32>
    %8 = arith.addf %2, %7 : vector<256x128xf32>
    %9 = vector.extract_strided_slice %1 {offsets = [0, 1, 0], sizes = [16, 16, 4], strides = [1, 1, 1]} : vector<18x18x4xbf16> to vector<16x16x4xbf16>
    %10 = vector.shape_cast %9 : vector<16x16x4xbf16> to vector<256x4xbf16>
    %c1 = arith.constant 1 : index
    %c0_7 = arith.constant 0 : index
    %c0_8 = arith.constant 0 : index
    %11 = vector.load %arg2[%c1, %c0_7, %c0_8] : memref<9x4x128xbf16, #tpu.memory_space<vmem>>, vector<1x4x128xbf16>
    %12 = vector.shape_cast %11 : vector<1x4x128xbf16> to vector<4x128xbf16>
    %cst_9 = arith.constant dense<0.000000e+00> : vector<256x128xf32>
    %13 = tpu.matmul %10, %12, %cst_9 {dimension_numbers = #tpu.dot_dimension_numbers<[1], [0], [0], [1], [0, 0, 1, 1], [], []>} : vector<256x4xbf16>, vector<4x128xbf16>, vector<256x128xf32> -> vector<256x128xf32>
    %14 = arith.addf %8, %13 : vector<256x128xf32>
    %15 = vector.extract_strided_slice %1 {offsets = [0, 2, 0], sizes = [16, 16, 4], strides = [1, 1, 1]} : vector<18x18x4xbf16> to vector<16x16x4xbf16>
    %16 = vector.shape_cast %15 : vector<16x16x4xbf16> to vector<256x4xbf16>
    %c2 = arith.constant 2 : index
    %c0_10 = arith.constant 0 : index
    %c0_11 = arith.constant 0 : index
    %17 = vector.load %arg2[%c2, %c0_10, %c0_11] : memref<9x4x128xbf16, #tpu.memory_space<vmem>>, vector<1x4x128xbf16>
    %18 = vector.shape_cast %17 : vector<1x4x128xbf16> to vector<4x128xbf16>
    %cst_12 = arith.constant dense<0.000000e+00> : vector<256x128xf32>
    %19 = tpu.matmul %16, %18, %cst_12 {dimension_numbers = #tpu.dot_dimension_numbers<[1], [0], [0], [1], [0, 0, 1, 1], [], []>} : vector<256x4xbf16>, vector<4x128xbf16>, vector<256x128xf32> -> vector<256x128xf32>
    %20 = arith.addf %14, %19 : vector<256x128xf32>
    %21 = vector.extract_strided_slice %1 {offsets = [1, 0, 0], sizes = [16, 16, 4], strides = [1, 1, 1]} : vector<18x18x4xbf16> to vector<16x16x4xbf16>
    %22 = vector.shape_cast %21 : vector<16x16x4xbf16> to vector<256x4xbf16>
    %c3 = arith.constant 3 : index
    %c0_13 = arith.constant 0 : index
    %c0_14 = arith.constant 0 : index
    %23 = vector.load %arg2[%c3, %c0_13, %c0_14] : memref<9x4x128xbf16, #tpu.memory_space<vmem>>, vector<1x4x128xbf16>
    %24 = vector.shape_cast %23 : vector<1x4x128xbf16> to vector<4x128xbf16>
    %cst_15 = arith.constant dense<0.000000e+00> : vector<256x128xf32>
    %25 = tpu.matmul %22, %24, %cst_15 {dimension_numbers = #tpu.dot_dimension_numbers<[1], [0], [0], [1], [0, 0, 1, 1], [], []>} : vector<256x4xbf16>, vector<4x128xbf16>, vector<256x128xf32> -> vector<256x128xf32>
    %26 = arith.addf %20, %25 : vector<256x128xf32>
    %27 = vector.extract_strided_slice %1 {offsets = [1, 1, 0], sizes = [16, 16, 4], strides = [1, 1, 1]} : vector<18x18x4xbf16> to vector<16x16x4xbf16>
    %28 = vector.shape_cast %27 : vector<16x16x4xbf16> to vector<256x4xbf16>
    %c4 = arith.constant 4 : index
    %c0_16 = arith.constant 0 : index
    %c0_17 = arith.constant 0 : index
    %29 = vector.load %arg2[%c4, %c0_16, %c0_17] : memref<9x4x128xbf16, #tpu.memory_space<vmem>>, vector<1x4x128xbf16>
    %30 = vector.shape_cast %29 : vector<1x4x128xbf16> to vector<4x128xbf16>
    %cst_18 = arith.constant dense<0.000000e+00> : vector<256x128xf32>
    %31 = tpu.matmul %28, %30, %cst_18 {dimension_numbers = #tpu.dot_dimension_numbers<[1], [0], [0], [1], [0, 0, 1, 1], [], []>} : vector<256x4xbf16>, vector<4x128xbf16>, vector<256x128xf32> -> vector<256x128xf32>
    %32 = arith.addf %26, %31 : vector<256x128xf32>
    %33 = vector.extract_strided_slice %1 {offsets = [1, 2, 0], sizes = [16, 16, 4], strides = [1, 1, 1]} : vector<18x18x4xbf16> to vector<16x16x4xbf16>
    %34 = vector.shape_cast %33 : vector<16x16x4xbf16> to vector<256x4xbf16>
    %c5 = arith.constant 5 : index
    %c0_19 = arith.constant 0 : index
    %c0_20 = arith.constant 0 : index
    %35 = vector.load %arg2[%c5, %c0_19, %c0_20] : memref<9x4x128xbf16, #tpu.memory_space<vmem>>, vector<1x4x128xbf16>
    %36 = vector.shape_cast %35 : vector<1x4x128xbf16> to vector<4x128xbf16>
    %cst_21 = arith.constant dense<0.000000e+00> : vector<256x128xf32>
    %37 = tpu.matmul %34, %36, %cst_21 {dimension_numbers = #tpu.dot_dimension_numbers<[1], [0], [0], [1], [0, 0, 1, 1], [], []>} : vector<256x4xbf16>, vector<4x128xbf16>, vector<256x128xf32> -> vector<256x128xf32>
    %38 = arith.addf %32, %37 : vector<256x128xf32>
    %39 = vector.extract_strided_slice %1 {offsets = [2, 0, 0], sizes = [16, 16, 4], strides = [1, 1, 1]} : vector<18x18x4xbf16> to vector<16x16x4xbf16>
    %40 = vector.shape_cast %39 : vector<16x16x4xbf16> to vector<256x4xbf16>
    %c6 = arith.constant 6 : index
    %c0_22 = arith.constant 0 : index
    %c0_23 = arith.constant 0 : index
    %41 = vector.load %arg2[%c6, %c0_22, %c0_23] : memref<9x4x128xbf16, #tpu.memory_space<vmem>>, vector<1x4x128xbf16>
    %42 = vector.shape_cast %41 : vector<1x4x128xbf16> to vector<4x128xbf16>
    %cst_24 = arith.constant dense<0.000000e+00> : vector<256x128xf32>
    %43 = tpu.matmul %40, %42, %cst_24 {dimension_numbers = #tpu.dot_dimension_numbers<[1], [0], [0], [1], [0, 0, 1, 1], [], []>} : vector<256x4xbf16>, vector<4x128xbf16>, vector<256x128xf32> -> vector<256x128xf32>
    %44 = arith.addf %38, %43 : vector<256x128xf32>
    %45 = vector.extract_strided_slice %1 {offsets = [2, 1, 0], sizes = [16, 16, 4], strides = [1, 1, 1]} : vector<18x18x4xbf16> to vector<16x16x4xbf16>
    %46 = vector.shape_cast %45 : vector<16x16x4xbf16> to vector<256x4xbf16>
    %c7 = arith.constant 7 : index
    %c0_25 = arith.constant 0 : index
    %c0_26 = arith.constant 0 : index
    %47 = vector.load %arg2[%c7, %c0_25, %c0_26] : memref<9x4x128xbf16, #tpu.memory_space<vmem>>, vector<1x4x128xbf16>
    %48 = vector.shape_cast %47 : vector<1x4x128xbf16> to vector<4x128xbf16>
    %cst_27 = arith.constant dense<0.000000e+00> : vector<256x128xf32>
    %49 = tpu.matmul %46, %48, %cst_27 {dimension_numbers = #tpu.dot_dimension_numbers<[1], [0], [0], [1], [0, 0, 1, 1], [], []>} : vector<256x4xbf16>, vector<4x128xbf16>, vector<256x128xf32> -> vector<256x128xf32>
    %50 = arith.addf %44, %49 : vector<256x128xf32>
    %51 = vector.extract_strided_slice %1 {offsets = [2, 2, 0], sizes = [16, 16, 4], strides = [1, 1, 1]} : vector<18x18x4xbf16> to vector<16x16x4xbf16>
    %52 = vector.shape_cast %51 : vector<16x16x4xbf16> to vector<256x4xbf16>
    %c8 = arith.constant 8 : index
    %c0_28 = arith.constant 0 : index
    %c0_29 = arith.constant 0 : index
    %53 = vector.load %arg2[%c8, %c0_28, %c0_29] : memref<9x4x128xbf16, #tpu.memory_space<vmem>>, vector<1x4x128xbf16>
    %54 = vector.shape_cast %53 : vector<1x4x128xbf16> to vector<4x128xbf16>
    %cst_30 = arith.constant dense<0.000000e+00> : vector<256x128xf32>
    %55 = tpu.matmul %52, %54, %cst_30 {dimension_numbers = #tpu.dot_dimension_numbers<[1], [0], [0], [1], [0, 0, 1, 1], [], []>} : vector<256x4xbf16>, vector<4x128xbf16>, vector<256x128xf32> -> vector<256x128xf32>
    %56 = arith.addf %50, %55 : vector<256x128xf32>
    %cst_31 = arith.constant dense<0.000000e+00> : vector<128xf32>
    %57 = vector.multi_reduction <add>, %56, %cst_31 [0] : vector<256x128xf32> to vector<128xf32>
    %58 = vector.shape_cast %57 : vector<128xf32> to vector<1x128xf32>
    %59 = arith.mulf %56, %56 : vector<256x128xf32>
    %cst_32 = arith.constant dense<0.000000e+00> : vector<128xf32>
    %60 = vector.multi_reduction <add>, %59, %cst_32 [0] : vector<256x128xf32> to vector<128xf32>
    %61 = vector.shape_cast %60 : vector<128xf32> to vector<1x128xf32>
    %cst_33 = arith.constant 0.000000e+00 : f32
    %62 = vector.broadcast %cst_33 : f32 to vector<6x128xf32>
    %63 = tpu.concatenate %58, %61, %62 in 0 : vector<1x128xf32>, vector<1x128xf32>, vector<6x128xf32> -> vector<8x128xf32>
    %c0_34 = arith.constant 0 : index
    %c0_35 = arith.constant 0 : index
    %c0_36 = arith.constant 0 : index
    %64 = vector.load %arg3[%c0_34, %c0_35, %c0_36] : memref<1x8x128xf32, #tpu.memory_space<vmem>>, vector<1x8x128xf32>
    %65 = vector.shape_cast %64 : vector<1x8x128xf32> to vector<8x128xf32>
    %66 = vector.shape_cast %63 : vector<8x128xf32> to vector<1x8x128xf32>
    tpu.vector_store %arg3[%c0_34, %c0_35, %c0_36], %66 {strides = array<i32>} : memref<1x8x128xf32, #tpu.memory_space<vmem>>, vector<1x8x128xf32>,
    return
  }
  func.func @transform_0(%arg0: i32) -> (i32, i32, i32, i32) {
    %c0_i32 = arith.constant 0 : i32
    %c0_i32_0 = arith.constant 0 : i32
    %c0_i32_1 = arith.constant 0 : i32
    %c0_i32_2 = arith.constant 0 : i32
    return %arg0, %c0_i32, %c0_i32_0, %c0_i32_1 : i32, i32, i32, i32
  }
  func.func @transform_1(%arg0: i32) -> (i32, i32, i32) {
    %c0_i32 = arith.constant 0 : i32
    %c0_i32_0 = arith.constant 0 : i32
    %c0_i32_1 = arith.constant 0 : i32
    %c0_i32_2 = arith.constant 0 : i32
    return %c0_i32, %c0_i32_0, %c0_i32_1 : i32, i32, i32
  }
  func.func @transform_2(%arg0: i32) -> (i32, i32, i32) {
    %c0_i32 = arith.constant 0 : i32
    %c0_i32_0 = arith.constant 0 : i32
    %c0_i32_1 = arith.constant 0 : i32
    return %arg0, %c0_i32, %c0_i32_0 : i32, i32, i32
  }
}

</mosaic_0001>

<llo_original>
// kernel: tpu_custom_call.1
$region0: #{tpu_custom_call.1}
  #allocation0 [shape = 'u32[]', space=smem, size = 0x4, offset = 0x4, fixed_abs, tag = 'smem constant byte address 0x4 - core index']
  #allocation1 [shape = 'u32[144,128]{1,0:T(1,128)}', space=vmem, size = 0x12000, scoped, tag = 'internal scratch']
  %s0 = inlined_call_operand.vmem [shape: bf16[2,18,18,4], index: 0, kind: input, shape index: {}]
  %s1 = inlined_call_operand.vmem [shape: bf16[9,4,128], index: 1, kind: input, shape index: {}]
  %s2 = inlined_call_operand.hbm [shape: f32[2,8,128], index: 2, kind: output, shape index: {}]
  %s3 = sld [smem:[#allocation0]]
  $region41: #{tpu_custom_call.1} parent=0
    _
  %s5 = ssub.s32 1, %s3
  %s6 = scalar_select 0, %s5, %s3
  $region1: #{tpu_custom_call.1} parent=0
    #allocation2 [shape = 'u8[8192]{0}', space=vmem, size = 0x2000, scoped, tag = 'output window, operand 0']
    #allocation3 [shape = 's32[2]{0}', space=sflag, size = 0x8, scoped, tag = 'scoped memory for tpu_custom_call.1']
    %7 = vsyncpa [#allocation3], 0
    %s8 = scalar_lea.sflag [#allocation3], 1
    %9 = vsyncpa %s8, 0
    loop: start=0, step=1, limit=4
    $region2: #{tpu_custom_call.1} parent=1 // loop_pre_header
      _
    $region3: #{tpu_custom_call.1} parent=1 // loop_header
      %s11 = sphi 0, %s15
      %p12 = scmp.ge.s32.totalorder %s11, 4
      %s21 = sphi 0, %s23
      %s24 = sphi 0, %s21
      %s25 = sphi 0, %s24
      %s41 = sphi 0, %s25
      %s45 = sphi 0, %s45
      %s47 = sphi 0, %s45
      %s48 = sphi 0, %s47
      %s62 = sphi 0, %s48
      %s68 = sphi 0, %s70
      %s71 = sphi 0, %s68
      %s72 = sphi 0, %s71
      %s88 = sphi 0, %s72
    $region4: #{tpu_custom_call.1} parent=1 // loop_header_branch
      %14 = sbr.rel (%p12) target = $region8
    $region5: #{tpu_custom_call.1} parent=1 // loop_body
      %s16 = ssub.s32 %s11, 1
      %s17 = ssub.s32 %s11, 2
      %s18 = sadd.s32 %s11, 1
      %s19 = ssub.s32 %s11, %s18
      %p20 = scmp.eq.s32.totalorder %s19, 0
      %s22 = sadd.s32 %s21, 1
      %s23 = scalar_select %p20, %s21, %s22
      %p26 = pneg %p20
      %p27 = scmp.eq.s32.totalorder %s11, 1
      %p28 = por %p26, %p27
      %p29 = scmp.ne.s32.totalorder %s21, %s24
      %p30 = scmp.eq.s32.totalorder %s11, 0
      %p31 = por %p29, %p30
      %p32 = scmp.ne.s32.totalorder %s21, %s24
      %p33 = scmp.eq.s32.totalorder %s16, 1
      %p34 = por %p32, %p33
      %p35 = scmp.ne.s32.totalorder %s24, %s25
      %p36 = scmp.eq.s32.totalorder %s16, 0
      %p37 = por %p35, %p36
      %p38 = scmp.ne.s32.totalorder %s24, %s25
      %p39 = scmp.eq.s32.totalorder %s17, 1
      %p40 = por %p38, %p39
      %p42 = scmp.ne.s32.totalorder %s25, %s41
      %p43 = scmp.eq.s32.totalorder %s17, 0
      %p44 = por %p42, %p43
      %s46 = sadd.s32 %s45, 1
      %p49 = scmp.eq.s32.totalorder %s11, 1
      %p50 = scmp.ne.s32.totalorder %s45, %s47
      %p51 = scmp.eq.s32.totalorder %s11, 0
      %p52 = por %p50, %p51
      %p53 = scmp.ne.s32.totalorder %s45, %s47
      %p54 = scmp.eq.s32.totalorder %s16, 1
      %p55 = por %p53, %p54
      %p56 = scmp.ne.s32.totalorder %s47, %s48
      %p57 = scmp.eq.s32.totalorder %s16, 0
      %p58 = por %p56, %p57
      %p59 = scmp.ne.s32.totalorder %s47, %s48
      %p60 = scmp.eq.s32.totalorder %s17, 1
      %p61 = por %p59, %p60
      %p63 = scmp.ne.s32.totalorder %s48, %s62
      %p64 = scmp.eq.s32.totalorder %s17, 0
      %p65 = por %p63, %p64
      %s66 = ssub.s32 %s11, %s18
      %p67 = scmp.eq.s32.totalorder %s66, 0
      %s69 = sadd.s32 %s68, 1
      %s70 = scalar_select %p67, %s68, %s69
      %p73 = pneg %p67
      %p74 = scmp.eq.s32.totalorder %s11, 1
      %p75 = por %p73, %p74
      %p76 = scmp.ne.s32.totalorder %s68, %s71
      %p77 = scmp.eq.s32.totalorder %s11, 0
      %p78 = por %p76, %p77
      %p79 = scmp.ne.s32.totalorder %s68, %s71
      %p80 = scmp.eq.s32.totalorder %s16, 1
      %p81 = por %p79, %p80
      %p82 = scmp.ne.s32.totalorder %s71, %s72
      %p83 = scmp.eq.s32.totalorder %s16, 0
      %p84 = por %p82, %p83
      %p85 = scmp.ne.s32.totalorder %s71, %s72
      %p86 = scmp.eq.s32.totalorder %s17, 1
      %p87 = por %p85, %p86
      %p89 = scmp.ne.s32.totalorder %s72, %s88
      %p90 = scmp.eq.s32.totalorder %s17, 0
      %p91 = por %p89, %p90
      %p92 = scmp.le.s32.totalorder 1, %s11
      %p93 = scmp.lt.s32.totalorder %s11, 3
      %p94 = pnand %p92, %p93
      %p95 = pneg %p94
      // Predicated region
      $region9: #{tpu_custom_call.1} parent=5 // pred_check
        _
      $region10: #{tpu_custom_call.1} parent=5 // pred_check_branch
        %97 = sbr.rel (%p94) target = $region12
      $region11: #{tpu_custom_call.1} parent=5 // pred_region
        %s98 = ssub.s32 %s11, 1
        // Predicated region
        $region13: #{tpu_custom_call.1} parent=11 // pred_check
          %p99 = pneg %p58
        $region14: #{tpu_custom_call.1} parent=11 // pred_check_branch
          %101 = sbr.rel (%p99) target = $region16
        $region15: #{tpu_custom_call.1} parent=11 // pred_region
          _
        $region16: #{tpu_custom_call.1} parent=11 // pred_fallthru
          _
      $region12: #{tpu_custom_call.1} parent=5 // pred_fallthru
        _
      %p102 = scmp.lt.s32.totalorder %s11, 2
      // Predicated region
      $region17: #{tpu_custom_call.1} parent=5 // pred_check
        %p103 = pneg %p102
      $region18: #{tpu_custom_call.1} parent=5 // pred_check_branch
        %105 = sbr.rel (%p103) target = $region20
      $region19: #{tpu_custom_call.1} parent=5 // pred_region
        // Predicated region
        $region21: #{tpu_custom_call.1} parent=19 // pred_check
          %p106 = pneg %p31
        $region22: #{tpu_custom_call.1} parent=19 // pred_check_branch
          %108 = sbr.rel (%p106) target = $region24
        $region23: #{tpu_custom_call.1} parent=19 // pred_region
          %p109 = scmp.lt.s32.totalorder %s11, 1
          %s110 = scalar_select %p109, %s11, 1
          %s111 = smul.addr %s110, 54
          %s112 = smul.addr %s111, 4
          %s113 = scalar_lea.vmem %s0, %s112
        $region24: #{tpu_custom_call.1} parent=19 // pred_fallthru
          _
      $region20: #{tpu_custom_call.1} parent=5 // pred_fallthru
        _
      %p114 = scmp.le.s32.totalorder 1, %s11
      %p115 = scmp.lt.s32.totalorder %s11, 3
      %p116 = pnand %p114, %p115
      %p117 = pneg %p116
      // Predicated region
      $region25: #{tpu_custom_call.1} parent=5 // pred_check
        _
      $region26: #{tpu_custom_call.1} parent=5 // pred_check_branch
        %119 = sbr.rel (%p116) target = $region28
      $region27: #{tpu_custom_call.1} parent=5 // pred_region
        %s120 = ssub.s32 %s11, 1
        %p121 = scmp.lt.s32.totalorder %s16, 1
        %s122 = scalar_select %p121, %s16, 1
        %s123 = smul.addr %s122, 54
        %s124 = smul.addr %s123, 4
        %s125 = scalar_lea.vmem %s0, %s124
        %p126 = pneg %p37
        %p127 = pneg %p34
        %p128 = pneg %p58
        %p129 = pneg %p55
        %p130 = pneg %p84
        %p131 = pneg %p81
        %s132 = sand.u32 %s71, 1
        %s133 = scalar_lea.sflag [#allocation3], %s132
        %s134 = sand.u32 %s71, 1
        %s135 = smul.addr %s134, 8
        %s136 = scalar_lea.vmem [#allocation2], %s135
        %p137 = scmp.lt.s32.totalorder %s16, 1
        %s138 = scalar_select %p137, %s16, 1
        %s139 = smul.addr %s138, 54
        %s140 = smul.addr %s139, 4
        %s141 = scalar_lea.vmem %s0, %s140
        %v143 = vld [vmem:[%s141] sm:$0xf]
        %v144 = vld [vmem:[%s141 + $0x4] sm:$0xf]
        %v145 = vld [vmem:[%s141 + $0x8] sm:$0x1]
        %v146 = vld [vmem:[%s141 + $0xc] sm:$0xf]
        %v147 = vld [vmem:[%s141 + $0x10] sm:$0xf]
        %v148 = vld [vmem:[%s141 + $0x14] sm:$0x1]
        %v149 = vld [vmem:[%s141 + $0x18] sm:$0xf]
        %v150 = vld [vmem:[%s141 + $0x1c] sm:$0xf]
        %v151 = vld [vmem:[%s141 + $0x20] sm:$0x1]
        %v152 = vld [vmem:[%s141 + $0x24] sm:$0xf]
        %v153 = vld [vmem:[%s141 + $0x28] sm:$0xf]
        %v154 = vld [vmem:[%s141 + $0x2c] sm:$0x1]
        %v155 = vld [vmem:[%s141 + $0x30] sm:$0xf]
        %v156 = vld [vmem:[%s141 + $0x34] sm:$0xf]
        %v157 = vld [vmem:[%s141 + $0x38] sm:$0x1]
        %v158 = vld [vmem:[%s141 + $0x3c] sm:$0xf]
        %v159 = vld [vmem:[%s141 + $0x40] sm:$0xf]
        %v160 = vld [vmem:[%s141 + $0x44] sm:$0x1]
        %v161 = vld [vmem:[%s141 + $0x48] sm:$0xf]
        %v162 = vld [vmem:[%s141 + $0x4c] sm:$0xf]
        %v163 = vld [vmem:[%s141 + $0x50] sm:$0x1]
        %v164 = vld [vmem:[%s141 + $0x54] sm:$0xf]
        %v165 = vld [vmem:[%s141 + $0x58] sm:$0xf]
        %v166 = vld [vmem:[%s141 + $0x5c] sm:$0x1]
        %v167 = vld [vmem:[%s141 + $0x60] sm:$0xf]
        %v168 = vld [vmem:[%s141 + $0x64] sm:$0xf]
        %v169 = vld [vmem:[%s141 + $0x68] sm:$0x1]
        %v170 = vld [vmem:[%s141 + $0x6c] sm:$0xf]
        %v171 = vld [vmem:[%s141 + $0x70] sm:$0xf]
        %v172 = vld [vmem:[%s141 + $0x74] sm:$0x1]
        %v173 = vld [vmem:[%s141 + $0x78] sm:$0xf]
        %v174 = vld [vmem:[%s141 + $0x7c] sm:$0xf]
        %v175 = vld [vmem:[%s141 + $0x80] sm:$0x1]
        %v176 = vld [vmem:[%s141 + $0x84] sm:$0xf]
        %v177 = vld [vmem:[%s141 + $0x88] sm:$0xf]
        %v178 = vld [vmem:[%s141 + $0x8c] sm:$0x1]
        %v179 = vld [vmem:[%s141 + $0x90] sm:$0xf]
        %v180 = vld [vmem:[%s141 + $0x94] sm:$0xf]
        %v181 = vld [vmem:[%s141 + $0x98] sm:$0x1]
        %v182 = vld [vmem:[%s141 + $0x9c] sm:$0xf]
        %v183 = vld [vmem:[%s141 + $0xa0] sm:$0xf]
        %v184 = vld [vmem:[%s141 + $0xa4] sm:$0x1]
        %v185 = vld [vmem:[%s141 + $0xa8] sm:$0xf]
        %v186 = vld [vmem:[%s141 + $0xac] sm:$0xf]
        %v187 = vld [vmem:[%s141 + $0xb0] sm:$0x1]
        %v188 = vld [vmem:[%s141 + $0xb4] sm:$0xf]
        %v189 = vld [vmem:[%s141 + $0xb8] sm:$0xf]
        %v190 = vld [vmem:[%s141 + $0xbc] sm:$0x1]
        %v191 = vld [vmem:[%s141 + $0xc0] sm:$0xf]
        %v192 = vld [vmem:[%s141 + $0xc4] sm:$0xf]
        %v193 = vld [vmem:[%s141 + $0xc8] sm:$0x1]
        %v194 = vld [vmem:[%s141 + $0xcc] sm:$0xf]
        %v195 = vld [vmem:[%s141 + $0xd0] sm:$0xf]
        %v196 = vld [vmem:[%s141 + $0xd4] sm:$0x1]
        %v197 = vld [vmem:[%s1] sm:$0x3]
        %vm198 = vsmask.f32 3328
        %vm199 = vsmask.f32 7440
        %vm200 = vmor %vm198, %vm199
        %v202 = vshrl.u32 %v143, 16
        %v204 = vrot.slane %v202, 4
        %v205 = vshll.u32 %v143, 16
        %v207 = vrot.slane %v205, 5
        %v208 = vor.u32 %v204, %v207
        %v209 = vrot.slane %v208, 4
        %v211 = vshll.u32 %v144, 16
        %v213 = vrot.slane %v211, 5
        %v214 = vsel %vm200, %v209, %v213
        %v215 = vshrl.u32 %v144, 16
        %v217 = vrot.slane %v215, 4
        %v218 = vor.u32 %v217, %v213
        %v219 = vrot.slane %v218, 4
        %v221 = vshll.u32 %v145, 16
        %v223 = vrot.slane %v221, 5
        %v224 = vsel %vm200, %v219, %v223
        %v226 = vshrl.u32 %v146, 16
        %v228 = vrot.slane %v226, 4
        %v229 = vshll.u32 %v146, 16
        %v231 = vrot.slane %v229, 5
        %v232 = vor.u32 %v228, %v231
        %v233 = vrot.slane %v232, 4
        %v235 = vshll.u32 %v147, 16
        %v237 = vrot.slane %v235, 5
        %v238 = vsel %vm200, %v233, %v237
        %v239 = vshrl.u32 %v147, 16
        %v241 = vrot.slane %v239, 4
        %v242 = vor.u32 %v241, %v237
        %v243 = vrot.slane %v242, 4
        %v245 = vshll.u32 %v148, 16
        %v247 = vrot.slane %v245, 5
        %v248 = vsel %vm200, %v243, %v247
        %v250 = vshrl.u32 %v149, 16
        %v252 = vrot.slane %v250, 4
        %v253 = vshll.u32 %v149, 16
        %v255 = vrot.slane %v253, 5
        %v256 = vor.u32 %v252, %v255
        %v257 = vrot.slane %v256, 4
        %v259 = vshll.u32 %v150, 16
        %v261 = vrot.slane %v259, 5
        %v262 = vsel %vm200, %v257, %v261
        %v263 = vshrl.u32 %v150, 16
        %v265 = vrot.slane %v263, 4
        %v266 = vor.u32 %v265, %v261
        %v267 = vrot.slane %v266, 4
        %v269 = vshll.u32 %v151, 16
        %v271 = vrot.slane %v269, 5
        %v272 = vsel %vm200, %v267, %v271
        %v274 = vshrl.u32 %v152, 16
        %v276 = vrot.slane %v274, 4
        %v277 = vshll.u32 %v152, 16
        %v279 = vrot.slane %v277, 5
        %v280 = vor.u32 %v276, %v279
        %v281 = vrot.slane %v280, 4
        %v283 = vshll.u32 %v153, 16
        %v285 = vrot.slane %v283, 5
        %v286 = vsel %vm200, %v281, %v285
        %v287 = vshrl.u32 %v153, 16
        %v289 = vrot.slane %v287, 4
        %v290 = vor.u32 %v289, %v285
        %v291 = vrot.slane %v290, 4
        %v293 = vshll.u32 %v154, 16
        %v295 = vrot.slane %v293, 5
        %v296 = vsel %vm200, %v291, %v295
        %v298 = vshrl.u32 %v155, 16
        %v300 = vrot.slane %v298, 4
        %v301 = vshll.u32 %v155, 16
        %v303 = vrot.slane %v301, 5
        %v304 = vor.u32 %v300, %v303
        %v305 = vrot.slane %v304, 4
        %v307 = vshll.u32 %v156, 16
        %v309 = vrot.slane %v307, 5
        %v310 = vsel %vm200, %v305, %v309
        %v311 = vshrl.u32 %v156, 16
        %v313 = vrot.slane %v311, 4
        %v314 = vor.u32 %v313, %v309
        %v315 = vrot.slane %v314, 4
        %v317 = vshll.u32 %v157, 16
        %v319 = vrot.slane %v317, 5
        %v320 = vsel %vm200, %v315, %v319
        %v322 = vshrl.u32 %v158, 16
        %v324 = vrot.slane %v322, 4
        %v325 = vshll.u32 %v158, 16
        %v327 = vrot.slane %v325, 5
        %v328 = vor.u32 %v324, %v327
        %v329 = vrot.slane %v328, 4
        %v331 = vshll.u32 %v159, 16
        %v333 = vrot.slane %v331, 5
        %v334 = vsel %vm200, %v329, %v333
        %v335 = vshrl.u32 %v159, 16
        %v337 = vrot.slane %v335, 4
        %v338 = vor.u32 %v337, %v333
        %v339 = vrot.slane %v338, 4
        %v341 = vshll.u32 %v160, 16
        %v343 = vrot.slane %v341, 5
        %v344 = vsel %vm200, %v339, %v343
        %v346 = vshrl.u32 %v161, 16
        %v348 = vrot.slane %v346, 4
        %v349 = vshll.u32 %v161, 16
        %v351 = vrot.slane %v349, 5
        %v352 = vor.u32 %v348, %v351
        %v353 = vrot.slane %v352, 4
        %v355 = vshll.u32 %v162, 16
        %v357 = vrot.slane %v355, 5
        %v358 = vsel %vm200, %v353, %v357
        %v359 = vshrl.u32 %v162, 16
        %v361 = vrot.slane %v359, 4
        %v362 = vor.u32 %v361, %v357
        %v363 = vrot.slane %v362, 4
        %v365 = vshll.u32 %v163, 16
        %v367 = vrot.slane %v365, 5
        %v368 = vsel %vm200, %v363, %v367
        %v370 = vshrl.u32 %v164, 16
        %v372 = vrot.slane %v370, 4
        %v373 = vshll.u32 %v164, 16
        %v375 = vrot.slane %v373, 5
        %v376 = vor.u32 %v372, %v375
        %v377 = vrot.slane %v376, 4
        %v379 = vshll.u32 %v165, 16
        %v381 = vrot.slane %v379, 5
        %v382 = vsel %vm200, %v377, %v381
        %v383 = vshrl.u32 %v165, 16
        %v385 = vrot.slane %v383, 4
        %v386 = vor.u32 %v385, %v381
        %v387 = vrot.slane %v386, 4
        %v389 = vshll.u32 %v166, 16
        %v391 = vrot.slane %v389, 5
        %v392 = vsel %vm200, %v387, %v391
        %v394 = vshrl.u32 %v167, 16
        %v396 = vrot.slane %v394, 4
        %v397 = vshll.u32 %v167, 16
        %v399 = vrot.slane %v397, 5
        %v400 = vor.u32 %v396, %v399
        %v401 = vrot.slane %v400, 4
        %v403 = vshll.u32 %v168, 16
        %v405 = vrot.slane %v403, 5
        %v406 = vsel %vm200, %v401, %v405
        %v407 = vshrl.u32 %v168, 16
        %v409 = vrot.slane %v407, 4
        %v410 = vor.u32 %v409, %v405
        %v411 = vrot.slane %v410, 4
        %v413 = vshll.u32 %v169, 16
        %v415 = vrot.slane %v413, 5
        %v416 = vsel %vm200, %v411, %v415
        %v418 = vshrl.u32 %v170, 16
        %v420 = vrot.slane %v418, 4
        %v421 = vshll.u32 %v170, 16
        %v423 = vrot.slane %v421, 5
        %v424 = vor.u32 %v420, %v423
        %v425 = vrot.slane %v424, 4
        %v427 = vshll.u32 %v171, 16
        %v429 = vrot.slane %v427, 5
        %v430 = vsel %vm200, %v425, %v429
        %v431 = vshrl.u32 %v171, 16
        %v433 = vrot.slane %v431, 4
        %v434 = vor.u32 %v433, %v429
        %v435 = vrot.slane %v434, 4
        %v437 = vshll.u32 %v172, 16
        %v439 = vrot.slane %v437, 5
        %v440 = vsel %vm200, %v435, %v439
        %v442 = vshrl.u32 %v173, 16
        %v444 = vrot.slane %v442, 4
        %v445 = vshll.u32 %v173, 16
        %v447 = vrot.slane %v445, 5
        %v448 = vor.u32 %v444, %v447
        %v449 = vrot.slane %v448, 4
        %v451 = vshll.u32 %v174, 16
        %v453 = vrot.slane %v451, 5
        %v454 = vsel %vm200, %v449, %v453
        %v455 = vshrl.u32 %v174, 16
        %v457 = vrot.slane %v455, 4
        %v458 = vor.u32 %v457, %v453
        %v459 = vrot.slane %v458, 4
        %v461 = vshll.u32 %v175, 16
        %v463 = vrot.slane %v461, 5
        %v464 = vsel %vm200, %v459, %v463
        %v466 = vshrl.u32 %v176, 16
        %v468 = vrot.slane %v466, 4
        %v469 = vshll.u32 %v176, 16
        %v471 = vrot.slane %v469, 5
        %v472 = vor.u32 %v468, %v471
        %v473 = vrot.slane %v472, 4
        %v475 = vshll.u32 %v177, 16
        %v477 = vrot.slane %v475, 5
        %v478 = vsel %vm200, %v473, %v477
        %v479 = vshrl.u32 %v177, 16
        %v481 = vrot.slane %v479, 4
        %v482 = vor.u32 %v481, %v477
        %v483 = vrot.slane %v482, 4
        %v485 = vshll.u32 %v178, 16
        %v487 = vrot.slane %v485, 5
        %v488 = vsel %vm200, %v483, %v487
        %v490 = vshrl.u32 %v179, 16
        %v492 = vrot.slane %v490, 4
        %v493 = vshll.u32 %v179, 16
        %v495 = vrot.slane %v493, 5
        %v496 = vor.u32 %v492, %v495
        %v497 = vrot.slane %v496, 4
        %v499 = vshll.u32 %v180, 16
        %v501 = vrot.slane %v499, 5
        %v502 = vsel %vm200, %v497, %v501
        %v503 = vshrl.u32 %v180, 16
        %v505 = vrot.slane %v503, 4
        %v506 = vor.u32 %v505, %v501
        %v507 = vrot.slane %v506, 4
        %v509 = vshll.u32 %v181, 16
        %v511 = vrot.slane %v509, 5
        %v512 = vsel %vm200, %v507, %v511
        %v514 = vshrl.u32 %v182, 16
        %v516 = vrot.slane %v514, 4
        %v517 = vshll.u32 %v182, 16
        %v519 = vrot.slane %v517, 5
        %v520 = vor.u32 %v516, %v519
        %v521 = vrot.slane %v520, 4
        %v523 = vshll.u32 %v183, 16
        %v525 = vrot.slane %v523, 5
        %v526 = vsel %vm200, %v521, %v525
        %v527 = vshrl.u32 %v183, 16
        %v529 = vrot.slane %v527, 4
        %v530 = vor.u32 %v529, %v525
        %v531 = vrot.slane %v530, 4
        %v533 = vshll.u32 %v184, 16
        %v535 = vrot.slane %v533, 5
        %v536 = vsel %vm200, %v531, %v535
        %v538 = vshrl.u32 %v185, 16
        %v540 = vrot.slane %v538, 4
        %v541 = vshll.u32 %v185, 16
        %v543 = vrot.slane %v541, 5
        %v544 = vor.u32 %v540, %v543
        %v545 = vrot.slane %v544, 4
        %v547 = vshll.u32 %v186, 16
        %v549 = vrot.slane %v547, 5
        %v550 = vsel %vm200, %v545, %v549
        %v551 = vshrl.u32 %v186, 16
        %v553 = vrot.slane %v551, 4
        %v554 = vor.u32 %v553, %v549
        %v555 = vrot.slane %v554, 4
        %v557 = vshll.u32 %v187, 16
        %v559 = vrot.slane %v557, 5
        %v560 = vsel %vm200, %v555, %v559
        %v562 = vshrl.u32 %v188, 16
        %v564 = vrot.slane %v562, 4
        %v565 = vshll.u32 %v188, 16
        %v567 = vrot.slane %v565, 5
        %v568 = vor.u32 %v564, %v567
        %v569 = vrot.slane %v568, 4
        %v571 = vshll.u32 %v189, 16
        %v573 = vrot.slane %v571, 5
        %v574 = vsel %vm200, %v569, %v573
        %v575 = vshrl.u32 %v189, 16
        %v577 = vrot.slane %v575, 4
        %v578 = vor.u32 %v577, %v573
        %v579 = vrot.slane %v578, 4
        %v581 = vshll.u32 %v190, 16
        %v583 = vrot.slane %v581, 5
        %v584 = vsel %vm200, %v579, %v583
        %s585 = scalar_lea.vmem %s1, 2
        %v586 = vld [vmem:[%s585] sm:$0x3]
        %v587 = vunpack.c.l.b16 %v214
        %v588 = vunpack.c.l.b16 %v224
        %v589 = vunpack.c.l.b16 %v238
        %v590 = vunpack.c.l.b16 %v248
        %v591 = vunpack.c.l.b16 %v262
        %v592 = vunpack.c.l.b16 %v272
        %v593 = vunpack.c.l.b16 %v286
        %v594 = vunpack.c.l.b16 %v296
        %v595 = vunpack.c.l.b16 %v310
        %v596 = vunpack.c.l.b16 %v320
        %v597 = vunpack.c.l.b16 %v334
        %v598 = vunpack.c.l.b16 %v344
        %v599 = vunpack.c.l.b16 %v358
        %v600 = vunpack.c.l.b16 %v368
        %v601 = vunpack.c.l.b16 %v382
        %v602 = vunpack.c.l.b16 %v392
        %v603 = vunpack.c.l.b16 %v406
        %v604 = vunpack.c.l.b16 %v416
        %v605 = vunpack.c.l.b16 %v430
        %v606 = vunpack.c.l.b16 %v440
        %v607 = vunpack.c.l.b16 %v454
        %v608 = vunpack.c.l.b16 %v464
        %v609 = vunpack.c.l.b16 %v478
        %v610 = vunpack.c.l.b16 %v488
        %v611 = vunpack.c.l.b16 %v502
        %v612 = vunpack.c.l.b16 %v512
        %v613 = vunpack.c.l.b16 %v526
        %v614 = vunpack.c.l.b16 %v536
        %v615 = vunpack.c.l.b16 %v550
        %v616 = vunpack.c.l.b16 %v560
        %v617 = vunpack.c.l.b16 %v574
        %v618 = vunpack.c.l.b16 %v584
        %v619 = vpack.c.b16 %v588, %v587
        %v620 = vpack.c.b16 %v590, %v589
        %v621 = vpack.c.b16 %v592, %v591
        %v622 = vpack.c.b16 %v594, %v593
        %v623 = vpack.c.b16 %v596, %v595
        %v624 = vpack.c.b16 %v598, %v597
        %v625 = vpack.c.b16 %v600, %v599
        %v626 = vpack.c.b16 %v602, %v601
        %v627 = vpack.c.b16 %v604, %v603
        %v628 = vpack.c.b16 %v606, %v605
        %v629 = vpack.c.b16 %v608, %v607
        %v630 = vpack.c.b16 %v610, %v609
        %v631 = vpack.c.b16 %v612, %v611
        %v632 = vpack.c.b16 %v614, %v613
        %v633 = vpack.c.b16 %v616, %v615
        %v634 = vpack.c.b16 %v618, %v617
        %vm635 = vcmask 31744
        %v637 = vsel %vm635, %v619, 0
        %v640 = vsel %vm635, %v620, 0
        %v643 = vsel %vm635, %v621, 0
        %v646 = vsel %vm635, %v622, 0
        %v649 = vsel %vm635, %v623, 0
        %v652 = vsel %vm635, %v624, 0
        %v655 = vsel %vm635, %v625, 0
        %v658 = vsel %vm635, %v626, 0
        %v661 = vsel %vm635, %v627, 0
        %v664 = vsel %vm635, %v628, 0
        %v667 = vsel %vm635, %v629, 0
        %v670 = vsel %vm635, %v630, 0
        %v673 = vsel %vm635, %v631, 0
        %v676 = vsel %vm635, %v632, 0
        %v679 = vsel %vm635, %v633, 0
        %v682 = vsel %vm635, %v634, 0
        %vm684 = vcmask 1041408
        %v686 = vsel %vm684, %v586, 0
        %688 = vmatprep.subr.bf16.mxu0 0
        %689 = vmatpush1.bf16.msra.mxu0 0
        %690 = vmatprep.subr.bf16.mxu0 0
        %691 = vmatpush1.bf16.msra.mxu0 0
        %692 = vmatprep.subr.bf16.mxu0 0
        %693 = vmatpush1.bf16.msra.mxu0 0
        %694 = vmatprep.subr.bf16.mxu0 0
        %695 = vmatpush1.bf16.msra.mxu0 0
        %696 = vmatprep.subr.bf16.mxu0 0
        %697 = vmatpush1.bf16.msra.mxu0 0
        %698 = vmatprep.subr.bf16.mxu0 0
        %699 = vmatpush1.bf16.msra.mxu0 0
        %700 = vmatprep.subr.bf16.mxu0 0
        %701 = vmatpush1.bf16.msra.mxu0 0
        %702 = vmatprep.subr.bf16.mxu0 0
        %703 = vmatpush1.bf16.msra.mxu0 %v686
        %704 = vmatprep.subr.bf16.mxu0 0
        %705 = vmatpush2.bf16.msra.mxu0 0
        %706 = vmatprep.subr.bf16.mxu0 0
        %707 = vmatpush2.bf16.msra.mxu0 0
        %708 = vmatprep.subr.bf16.mxu0 0
        %709 = vmatpush2.bf16.msra.mxu0 0
        %710 = vmatprep.subr.bf16.mxu0 0
        %711 = vmatpush2.bf16.msra.mxu0 0
        %712 = vmatprep.subr.bf16.mxu0 0
        %713 = vmatpush2.bf16.msra.mxu0 0
        %714 = vmatprep.subr.bf16.mxu0 0
        %715 = vmatpush2.bf16.msra.mxu0 0
        %716 = vmatprep.subr.bf16.mxu0 0
        %717 = vmatpush2.bf16.msra.mxu0 0
        %718 = vmatprep.subr.bf16.mxu0 0
        %719 = vmatpush2.bf16.msra.mxu0 0
        %720 = vmatprep.mubr.bf16.mxu0 0
        %721 = vmatmul.mubr.bf16.gmra.mxu0 %v637
        %v722 = vpop.f32.mrf.mxu0
        %v723 = vadd.f32 0.0, %v722
        %v724 = vpop.f32.mrf.mxu0
        %v725 = vpop.f32.mrf.mxu0
        %v726 = vadd.f32 0.0, %v725
        %v727 = vpop.f32.mrf.mxu0
        %728 = vmatprep.mubr.bf16.mxu0 0
        %729 = vmatmul.mubr.bf16.gmra.mxu0 %v640
        %v730 = vpop.f32.mrf.mxu0
        %v731 = vadd.f32 0.0, %v730
        %v732 = vpop.f32.mrf.mxu0
        %v733 = vpop.f32.mrf.mxu0
        %v734 = vadd.f32 0.0, %v733
        %v735 = vpop.f32.mrf.mxu0
        %736 = vmatprep.mubr.bf16.mxu0 0
        %737 = vmatmul.mubr.bf16.gmra.mxu0 %v643
        %v738 = vpop.f32.mrf.mxu0
        %v739 = vadd.f32 0.0, %v738
        %v740 = vpop.f32.mrf.mxu0
        %v741 = vpop.f32.mrf.mxu0
        %v742 = vadd.f32 0.0, %v741
        %v743 = vpop.f32.mrf.mxu0
        %744 = vmatprep.mubr.bf16.mxu0 0
        %745 = vmatmul.mubr.bf16.gmra.mxu0 %v646
        %v746 = vpop.f32.mrf.mxu0
        %v747 = vadd.f32 0.0, %v746
        %v748 = vpop.f32.mrf.mxu0
        %v749 = vpop.f32.mrf.mxu0
        %v750 = vadd.f32 0.0, %v749
        %v751 = vpop.f32.mrf.mxu0
        %752 = vmatprep.mubr.bf16.mxu0 0
        %753 = vmatmul.mubr.bf16.gmra.mxu0 %v649
        %v754 = vpop.f32.mrf.mxu0
        %v755 = vadd.f32 0.0, %v754
        %v756 = vpop.f32.mrf.mxu0
        %v757 = vpop.f32.mrf.mxu0
        %v758 = vadd.f32 0.0, %v757
        %v759 = vpop.f32.mrf.mxu0
        %760 = vmatprep.mubr.bf16.mxu0 0
        %761 = vmatmul.mubr.bf16.gmra.mxu0 %v652
        %v762 = vpop.f32.mrf.mxu0
        %v763 = vadd.f32 0.0, %v762
        %v764 = vpop.f32.mrf.mxu0
        %v765 = vpop.f32.mrf.mxu0
        %v766 = vadd.f32 0.0, %v765
        %v767 = vpop.f32.mrf.mxu0
        %768 = vmatprep.mubr.bf16.mxu0 0
        %769 = vmatmul.mubr.bf16.gmra.mxu0 %v655
        %v770 = vpop.f32.mrf.mxu0
        %v771 = vadd.f32 0.0, %v770
        %v772 = vpop.f32.mrf.mxu0
        %v773 = vpop.f32.mrf.mxu0
        %v774 = vadd.f32 0.0, %v773
        %v775 = vpop.f32.mrf.mxu0
        %776 = vmatprep.mubr.bf16.mxu0 0
        %777 = vmatmul.mubr.bf16.gmra.mxu0 %v658
        %v778 = vpop.f32.mrf.mxu0
        %v779 = vadd.f32 0.0, %v778
        %v780 = vpop.f32.mrf.mxu0
        %v781 = vpop.f32.mrf.mxu0
        %v782 = vadd.f32 0.0, %v781
        %v783 = vpop.f32.mrf.mxu0
        %784 = vmatprep.mubr.bf16.mxu0 0
        %785 = vmatmul.mubr.bf16.gmra.mxu0 %v661
        %v786 = vpop.f32.mrf.mxu0
        %v787 = vadd.f32 0.0, %v786
        %v788 = vpop.f32.mrf.mxu0
        %v789 = vpop.f32.mrf.mxu0
        %v790 = vadd.f32 0.0, %v789
        %v791 = vpop.f32.mrf.mxu0
        %792 = vmatprep.mubr.bf16.mxu0 0
        %793 = vmatmul.mubr.bf16.gmra.mxu0 %v664
        %v794 = vpop.f32.mrf.mxu0
        %v795 = vadd.f32 0.0, %v794
        %v796 = vpop.f32.mrf.mxu0
        %v797 = vpop.f32.mrf.mxu0
        %v798 = vadd.f32 0.0, %v797
        %v799 = vpop.f32.mrf.mxu0
        %800 = vmatprep.mubr.bf16.mxu0 0
        %801 = vmatmul.mubr.bf16.gmra.mxu0 %v667
        %v802 = vpop.f32.mrf.mxu0
        %v803 = vadd.f32 0.0, %v802
        %v804 = vpop.f32.mrf.mxu0
        %v805 = vpop.f32.mrf.mxu0
        %v806 = vadd.f32 0.0, %v805
        %v807 = vpop.f32.mrf.mxu0
        %808 = vmatprep.mubr.bf16.mxu0 0
        %809 = vmatmul.mubr.bf16.gmra.mxu0 %v670
        %v810 = vpop.f32.mrf.mxu0
        %v811 = vadd.f32 0.0, %v810
        %v812 = vpop.f32.mrf.mxu0
        %v813 = vpop.f32.mrf.mxu0
        %v814 = vadd.f32 0.0, %v813
        %v815 = vpop.f32.mrf.mxu0
        %816 = vmatprep.mubr.bf16.mxu0 0
        %817 = vmatmul.mubr.bf16.gmra.mxu0 %v673
        %v818 = vpop.f32.mrf.mxu0
        %v819 = vadd.f32 0.0, %v818
        %v820 = vpop.f32.mrf.mxu0
        %v821 = vpop.f32.mrf.mxu0
        %v822 = vadd.f32 0.0, %v821
        %v823 = vpop.f32.mrf.mxu0
        %824 = vmatprep.mubr.bf16.mxu0 0
        %825 = vmatmul.mubr.bf16.gmra.mxu0 %v676
        %v826 = vpop.f32.mrf.mxu0
        %v827 = vadd.f32 0.0, %v826
        %v828 = vpop.f32.mrf.mxu0
        %v829 = vpop.f32.mrf.mxu0
        %v830 = vadd.f32 0.0, %v829
        %v831 = vpop.f32.mrf.mxu0
        %832 = vmatprep.mubr.bf16.mxu0 0
        %833 = vmatmul.mubr.bf16.gmra.mxu0 %v679
        %v834 = vpop.f32.mrf.mxu0
        %v835 = vadd.f32 0.0, %v834
        %v836 = vpop.f32.mrf.mxu0
        %v837 = vpop.f32.mrf.mxu0
        %v838 = vadd.f32 0.0, %v837
        %v839 = vpop.f32.mrf.mxu0
        %840 = vmatprep.mubr.bf16.mxu0 0
        %841 = vmatmul.mubr.bf16.gmra.mxu0 %v682
        %v842 = vpop.f32.mrf.mxu0
        %v843 = vadd.f32 0.0, %v842
        %v844 = vpop.f32.mrf.mxu0
        %v845 = vpop.f32.mrf.mxu0
        %v846 = vadd.f32 0.0, %v845
        %v847 = vpop.f32.mrf.mxu0
        %848 = vdwg.mxu0
        %v881 = vunpack.c.l.b16 %v143
        %v882 = vunpack.c.l.b16 %v144
        %v883 = vunpack.c.l.b16 %v146
        %v884 = vunpack.c.l.b16 %v147
        %v885 = vunpack.c.l.b16 %v149
        %v886 = vunpack.c.l.b16 %v150
        %v887 = vunpack.c.l.b16 %v152
        %v888 = vunpack.c.l.b16 %v153
        %v889 = vunpack.c.l.b16 %v155
        %v890 = vunpack.c.l.b16 %v156
        %v891 = vunpack.c.l.b16 %v158
        %v892 = vunpack.c.l.b16 %v159
        %v893 = vunpack.c.l.b16 %v161
        %v894 = vunpack.c.l.b16 %v162
        %v895 = vunpack.c.l.b16 %v164
        %v896 = vunpack.c.l.b16 %v165
        %v897 = vunpack.c.l.b16 %v167
        %v898 = vunpack.c.l.b16 %v168
        %v899 = vunpack.c.l.b16 %v170
        %v900 = vunpack.c.l.b16 %v171
        %v901 = vunpack.c.l.b16 %v173
        %v902 = vunpack.c.l.b16 %v174
        %v903 = vunpack.c.l.b16 %v176
        %v904 = vunpack.c.l.b16 %v177
        %v905 = vunpack.c.l.b16 %v179
        %v906 = vunpack.c.l.b16 %v180
        %v907 = vunpack.c.l.b16 %v182
        %v908 = vunpack.c.l.b16 %v183
        %v909 = vunpack.c.l.b16 %v185
        %v910 = vunpack.c.l.b16 %v186
        %v911 = vunpack.c.l.b16 %v188
        %v912 = vunpack.c.l.b16 %v189
        %v913 = vpack.c.b16 %v882, %v881
        %v914 = vpack.c.b16 %v884, %v883
        %v915 = vpack.c.b16 %v886, %v885
        %v916 = vpack.c.b16 %v888, %v887
        %v917 = vpack.c.b16 %v890, %v889
        %v918 = vpack.c.b16 %v892, %v891
        %v919 = vpack.c.b16 %v894, %v893
        %v920 = vpack.c.b16 %v896, %v895
        %v921 = vpack.c.b16 %v898, %v897
        %v922 = vpack.c.b16 %v900, %v899
        %v923 = vpack.c.b16 %v902, %v901
        %v924 = vpack.c.b16 %v904, %v903
        %v925 = vpack.c.b16 %v906, %v905
        %v926 = vpack.c.b16 %v908, %v907
        %v927 = vpack.c.b16 %v910, %v909
        %v928 = vpack.c.b16 %v912, %v911
        %v930 = vsel %vm635, %v913, 0
        %v933 = vsel %vm635, %v914, 0
        %v936 = vsel %vm635, %v915, 0
        %v939 = vsel %vm635, %v916, 0
        %v942 = vsel %vm635, %v917, 0
        %v945 = vsel %vm635, %v918, 0
        %v948 = vsel %vm635, %v919, 0
        %v951 = vsel %vm635, %v920, 0
        %v954 = vsel %vm635, %v921, 0
        %v957 = vsel %vm635, %v922, 0
        %v960 = vsel %vm635, %v923, 0
        %v963 = vsel %vm635, %v924, 0
        %v966 = vsel %vm635, %v925, 0
        %v969 = vsel %vm635, %v926, 0
        %v972 = vsel %vm635, %v927, 0
        %v975 = vsel %vm635, %v928, 0
        %v978 = vsel %vm684, %v197, 0
        %980 = vmatprep.subr.bf16.mxu0 0
        %981 = vmatpush1.bf16.msra.mxu0 0
        %982 = vmatprep.subr.bf16.mxu0 0
        %983 = vmatpush1.bf16.msra.mxu0 0
        %984 = vmatprep.subr.bf16.mxu0 0
        %985 = vmatpush1.bf16.msra.mxu0 0
        %986 = vmatprep.subr.bf16.mxu0 0
        %987 = vmatpush1.bf16.msra.mxu0 0
        %988 = vmatprep.subr.bf16.mxu0 0
        %989 = vmatpush1.bf16.msra.mxu0 0
        %990 = vmatprep.subr.bf16.mxu0 0
        %991 = vmatpush1.bf16.msra.mxu0 0
        %992 = vmatprep.subr.bf16.mxu0 0
        %993 = vmatpush1.bf16.msra.mxu0 0
        %994 = vmatprep.subr.bf16.mxu0 0
        %995 = vmatpush1.bf16.msra.mxu0 %v978
        %996 = vmatprep.subr.bf16.mxu0 0
        %997 = vmatpush2.bf16.msra.mxu0 0
        %998 = vmatprep.subr.bf16.mxu0 0
        %999 = vmatpush2.bf16.msra.mxu0 0
        %1000 = vmatprep.subr.bf16.mxu0 0
        %1001 = vmatpush2.bf16.msra.mxu0 0
        %1002 = vmatprep.subr.bf16.mxu0 0
        %1003 = vmatpush2.bf16.msra.mxu0 0
        %1004 = vmatprep.subr.bf16.mxu0 0
        %1005 = vmatpush2.bf16.msra.mxu0 0
        %1006 = vmatprep.subr.bf16.mxu0 0
        %1007 = vmatpush2.bf16.msra.mxu0 0
        %1008 = vmatprep.subr.bf16.mxu0 0
        %1009 = vmatpush2.bf16.msra.mxu0 0
        %1010 = vmatprep.subr.bf16.mxu0 0
        %1011 = vmatpush2.bf16.msra.mxu0 0
        %1012 = vmatprep.mubr.bf16.mxu0 0
        %1013 = vmatmul.mubr.bf16.gmra.mxu0 %v930
        %v1014 = vpop.f32.mrf.mxu0
        %v1015 = vadd.f32 %v723, %v1014
        %v1016 = vpop.f32.mrf.mxu0
        %v1017 = vpop.f32.mrf.mxu0
        %v1018 = vadd.f32 %v726, %v1017
        %v1019 = vpop.f32.mrf.mxu0
        %1020 = vmatprep.mubr.bf16.mxu0 0
        %1021 = vmatmul.mubr.bf16.gmra.mxu0 %v933
        %v1022 = vpop.f32.mrf.mxu0
        %v1023 = vadd.f32 %v731, %v1022
        %v1024 = vpop.f32.mrf.mxu0
        %v1025 = vpop.f32.mrf.mxu0
        %v1026 = vadd.f32 %v734, %v1025
        %v1027 = vpop.f32.mrf.mxu0
        %1028 = vmatprep.mubr.bf16.mxu0 0
        %1029 = vmatmul.mubr.bf16.gmra.mxu0 %v936
        %v1030 = vpop.f32.mrf.mxu0
        %v1031 = vadd.f32 %v739, %v1030
        %v1032 = vpop.f32.mrf.mxu0
        %v1033 = vpop.f32.mrf.mxu0
        %v1034 = vadd.f32 %v742, %v1033
        %v1035 = vpop.f32.mrf.mxu0
        %1036 = vmatprep.mubr.bf16.mxu0 0
        %1037 = vmatmul.mubr.bf16.gmra.mxu0 %v939
        %v1038 = vpop.f32.mrf.mxu0
        %v1039 = vadd.f32 %v747, %v1038
        %v1040 = vpop.f32.mrf.mxu0
        %v1041 = vpop.f32.mrf.mxu0
        %v1042 = vadd.f32 %v750, %v1041
        %v1043 = vpop.f32.mrf.mxu0
        %1044 = vmatprep.mubr.bf16.mxu0 0
        %1045 = vmatmul.mubr.bf16.gmra.mxu0 %v942
        %v1046 = vpop.f32.mrf.mxu0
        %v1047 = vadd.f32 %v755, %v1046
        %v1048 = vpop.f32.mrf.mxu0
        %v1049 = vpop.f32.mrf.mxu0
        %v1050 = vadd.f32 %v758, %v1049
        %v1051 = vpop.f32.mrf.mxu0
        %1052 = vmatprep.mubr.bf16.mxu0 0
        %1053 = vmatmul.mubr.bf16.gmra.mxu0 %v945
        %v1054 = vpop.f32.mrf.mxu0
        %v1055 = vadd.f32 %v763, %v1054
        %v1056 = vpop.f32.mrf.mxu0
        %v1057 = vpop.f32.mrf.mxu0
        %v1058 = vadd.f32 %v766, %v1057
        %v1059 = vpop.f32.mrf.mxu0
        %1060 = vmatprep.mubr.bf16.mxu0 0
        %1061 = vmatmul.mubr.bf16.gmra.mxu0 %v948
        %v1062 = vpop.f32.mrf.mxu0
        %v1063 = vadd.f32 %v771, %v1062
        %v1064 = vpop.f32.mrf.mxu0
        %v1065 = vpop.f32.mrf.mxu0
        %v1066 = vadd.f32 %v774, %v1065
        %v1067 = vpop.f32.mrf.mxu0
        %1068 = vmatprep.mubr.bf16.mxu0 0
        %1069 = vmatmul.mubr.bf16.gmra.mxu0 %v951
        %v1070 = vpop.f32.mrf.mxu0
        %v1071 = vadd.f32 %v779, %v1070
        %v1072 = vpop.f32.mrf.mxu0
        %v1073 = vpop.f32.mrf.mxu0
        %v1074 = vadd.f32 %v782, %v1073
        %v1075 = vpop.f32.mrf.mxu0
        %1076 = vmatprep.mubr.bf16.mxu0 0
        %1077 = vmatmul.mubr.bf16.gmra.mxu0 %v954
        %v1078 = vpop.f32.mrf.mxu0
        %v1079 = vadd.f32 %v787, %v1078
        %v1080 = vpop.f32.mrf.mxu0
        %v1081 = vpop.f32.mrf.mxu0
        %v1082 = vadd.f32 %v790, %v1081
        %v1083 = vpop.f32.mrf.mxu0
        %1084 = vmatprep.mubr.bf16.mxu0 0
        %1085 = vmatmul.mubr.bf16.gmra.mxu0 %v957
        %v1086 = vpop.f32.mrf.mxu0
        %v1087 = vadd.f32 %v795, %v1086
        %v1088 = vpop.f32.mrf.mxu0
        %v1089 = vpop.f32.mrf.mxu0
        %v1090 = vadd.f32 %v798, %v1089
        %v1091 = vpop.f32.mrf.mxu0
        %1092 = vmatprep.mubr.bf16.mxu0 0
        %1093 = vmatmul.mubr.bf16.gmra.mxu0 %v960
        %v1094 = vpop.f32.mrf.mxu0
        %v1095 = vadd.f32 %v803, %v1094
        %v1096 = vpop.f32.mrf.mxu0
        %v1097 = vpop.f32.mrf.mxu0
        %v1098 = vadd.f32 %v806, %v1097
        %v1099 = vpop.f32.mrf.mxu0
        %1100 = vmatprep.mubr.bf16.mxu0 0
        %1101 = vmatmul.mubr.bf16.gmra.mxu0 %v963
        %v1102 = vpop.f32.mrf.mxu0
        %v1103 = vadd.f32 %v811, %v1102
        %v1104 = vpop.f32.mrf.mxu0
        %v1105 = vpop.f32.mrf.mxu0
        %v1106 = vadd.f32 %v814, %v1105
        %v1107 = vpop.f32.mrf.mxu0
        %1108 = vmatprep.mubr.bf16.mxu0 0
        %1109 = vmatmul.mubr.bf16.gmra.mxu0 %v966
        %v1110 = vpop.f32.mrf.mxu0
        %v1111 = vadd.f32 %v819, %v1110
        %v1112 = vpop.f32.mrf.mxu0
        %v1113 = vpop.f32.mrf.mxu0
        %v1114 = vadd.f32 %v822, %v1113
        %v1115 = vpop.f32.mrf.mxu0
        %1116 = vmatprep.mubr.bf16.mxu0 0
        %1117 = vmatmul.mubr.bf16.gmra.mxu0 %v969
        %v1118 = vpop.f32.mrf.mxu0
        %v1119 = vadd.f32 %v827, %v1118
        %v1120 = vpop.f32.mrf.mxu0
        %v1121 = vpop.f32.mrf.mxu0
        %v1122 = vadd.f32 %v830, %v1121
        %v1123 = vpop.f32.mrf.mxu0
        %1124 = vmatprep.mubr.bf16.mxu0 0
        %1125 = vmatmul.mubr.bf16.gmra.mxu0 %v972
        %v1126 = vpop.f32.mrf.mxu0
        %v1127 = vadd.f32 %v835, %v1126
        %v1128 = vpop.f32.mrf.mxu0
        %v1129 = vpop.f32.mrf.mxu0
        %v1130 = vadd.f32 %v838, %v1129
        %v1131 = vpop.f32.mrf.mxu0
        %1132 = vmatprep.mubr.bf16.mxu0 0
        %1133 = vmatmul.mubr.bf16.gmra.mxu0 %v975
        %v1134 = vpop.f32.mrf.mxu0
        %v1135 = vadd.f32 %v843, %v1134
        %v1136 = vpop.f32.mrf.mxu0
        %v1137 = vpop.f32.mrf.mxu0
        %v1138 = vadd.f32 %v846, %v1137
        %v1139 = vpop.f32.mrf.mxu0
        %1140 = vdwg.mxu0
        %vm1157 = vcmask 1042432
        %vm1158 = vcmask 1046532
        %vm1159 = vmor %vm1157, %vm1158
        %v1160 = vrot.slane %v143, 5
        %v1161 = vrot.slane %v1160, 4
        %v1162 = vrot.slane %v144, 5
        %v1163 = vsel %vm1159, %v1161, %v1162
        %v1164 = vrot.slane %v1162, 4
        %v1165 = vrot.slane %v145, 5
        %v1166 = vsel %vm1159, %v1164, %v1165
        %v1167 = vrot.slane %v146, 5
        %v1168 = vrot.slane %v1167, 4
        %v1169 = vrot.slane %v147, 5
        %v1170 = vsel %vm1159, %v1168, %v1169
        %v1171 = vrot.slane %v1169, 4
        %v1172 = vrot.slane %v148, 5
        %v1173 = vsel %vm1159, %v1171, %v1172
        %v1174 = vrot.slane %v149, 5
        %v1175 = vrot.slane %v1174, 4
        %v1176 = vrot.slane %v150, 5
        %v1177 = vsel %vm1159, %v1175, %v1176
        %v1178 = vrot.slane %v1176, 4
        %v1179 = vrot.slane %v151, 5
        %v1180 = vsel %vm1159, %v1178, %v1179
        %v1181 = vrot.slane %v152, 5
        %v1182 = vrot.slane %v1181, 4
        %v1183 = vrot.slane %v153, 5
        %v1184 = vsel %vm1159, %v1182, %v1183
        %v1185 = vrot.slane %v1183, 4
        %v1186 = vrot.slane %v154, 5
        %v1187 = vsel %vm1159, %v1185, %v1186
        %v1188 = vrot.slane %v155, 5
        %v1189 = vrot.slane %v1188, 4
        %v1190 = vrot.slane %v156, 5
        %v1191 = vsel %vm1159, %v1189, %v1190
        %v1192 = vrot.slane %v1190, 4
        %v1193 = vrot.slane %v157, 5
        %v1194 = vsel %vm1159, %v1192, %v1193
        %v1195 = vrot.slane %v158, 5
        %v1196 = vrot.slane %v1195, 4
        %v1197 = vrot.slane %v159, 5
        %v1198 = vsel %vm1159, %v1196, %v1197
        %v1199 = vrot.slane %v1197, 4
        %v1200 = vrot.slane %v160, 5
        %v1201 = vsel %vm1159, %v1199, %v1200
        %v1202 = vrot.slane %v161, 5
        %v1203 = vrot.slane %v1202, 4
        %v1204 = vrot.slane %v162, 5
        %v1205 = vsel %vm1159, %v1203, %v1204
        %v1206 = vrot.slane %v1204, 4
        %v1207 = vrot.slane %v163, 5
        %v1208 = vsel %vm1159, %v1206, %v1207
        %v1209 = vrot.slane %v164, 5
        %v1210 = vrot.slane %v1209, 4
        %v1211 = vrot.slane %v165, 5
        %v1212 = vsel %vm1159, %v1210, %v1211
        %v1213 = vrot.slane %v1211, 4
        %v1214 = vrot.slane %v166, 5
        %v1215 = vsel %vm1159, %v1213, %v1214
        %v1216 = vrot.slane %v167, 5
        %v1217 = vrot.slane %v1216, 4
        %v1218 = vrot.slane %v168, 5
        %v1219 = vsel %vm1159, %v1217, %v1218
        %v1220 = vrot.slane %v1218, 4
        %v1221 = vrot.slane %v169, 5
        %v1222 = vsel %vm1159, %v1220, %v1221
        %v1223 = vrot.slane %v170, 5
        %v1224 = vrot.slane %v1223, 4
        %v1225 = vrot.slane %v171, 5
        %v1226 = vsel %vm1159, %v1224, %v1225
        %v1227 = vrot.slane %v1225, 4
        %v1228 = vrot.slane %v172, 5
        %v1229 = vsel %vm1159, %v1227, %v1228
        %v1230 = vrot.slane %v173, 5
        %v1231 = vrot.slane %v1230, 4
        %v1232 = vrot.slane %v174, 5
        %v1233 = vsel %vm1159, %v1231, %v1232
        %v1234 = vrot.slane %v1232, 4
        %v1235 = vrot.slane %v175, 5
        %v1236 = vsel %vm1159, %v1234, %v1235
        %v1237 = vrot.slane %v176, 5
        %v1238 = vrot.slane %v1237, 4
        %v1239 = vrot.slane %v177, 5
        %v1240 = vsel %vm1159, %v1238, %v1239
        %v1241 = vrot.slane %v1239, 4
        %v1242 = vrot.slane %v178, 5
        %v1243 = vsel %vm1159, %v1241, %v1242
        %v1244 = vrot.slane %v179, 5
        %v1245 = vrot.slane %v1244, 4
        %v1246 = vrot.slane %v180, 5
        %v1247 = vsel %vm1159, %v1245, %v1246
        %v1248 = vrot.slane %v1246, 4
        %v1249 = vrot.slane %v181, 5
        %v1250 = vsel %vm1159, %v1248, %v1249
        %v1251 = vrot.slane %v182, 5
        %v1252 = vrot.slane %v1251, 4
        %v1253 = vrot.slane %v183, 5
        %v1254 = vsel %vm1159, %v1252, %v1253
        %v1255 = vrot.slane %v1253, 4
        %v1256 = vrot.slane %v184, 5
        %v1257 = vsel %vm1159, %v1255, %v1256
        %v1258 = vrot.slane %v185, 5
        %v1259 = vrot.slane %v1258, 4
        %v1260 = vrot.slane %v186, 5
        %v1261 = vsel %vm1159, %v1259, %v1260
        %v1262 = vrot.slane %v1260, 4
        %v1263 = vrot.slane %v187, 5
        %v1264 = vsel %vm1159, %v1262, %v1263
        %v1265 = vrot.slane %v188, 5
        %v1266 = vrot.slane %v1265, 4
        %v1267 = vrot.slane %v189, 5
        %v1268 = vsel %vm1159, %v1266, %v1267
        %v1269 = vrot.slane %v1267, 4
        %v1270 = vrot.slane %v190, 5
        %v1271 = vsel %vm1159, %v1269, %v1270
        %s1272 = scalar_lea.vmem %s1, 4
        %v1273 = vld [vmem:[%s1272] sm:$0x3]
        %v1274 = vunpack.c.l.b16 %v1163
        %v1275 = vunpack.c.l.b16 %v1166
        %v1276 = vunpack.c.l.b16 %v1170
        %v1277 = vunpack.c.l.b16 %v1173
        %v1278 = vunpack.c.l.b16 %v1177
        %v1279 = vunpack.c.l.b16 %v1180
        %v1280 = vunpack.c.l.b16 %v1184
        %v1281 = vunpack.c.l.b16 %v1187
        %v1282 = vunpack.c.l.b16 %v1191
        %v1283 = vunpack.c.l.b16 %v1194
        %v1284 = vunpack.c.l.b16 %v1198
        %v1285 = vunpack.c.l.b16 %v1201
        %v1286 = vunpack.c.l.b16 %v1205
        %v1287 = vunpack.c.l.b16 %v1208
        %v1288 = vunpack.c.l.b16 %v1212
        %v1289 = vunpack.c.l.b16 %v1215
        %v1290 = vunpack.c.l.b16 %v1219
        %v1291 = vunpack.c.l.b16 %v1222
        %v1292 = vunpack.c.l.b16 %v1226
        %v1293 = vunpack.c.l.b16 %v1229
        %v1294 = vunpack.c.l.b16 %v1233
        %v1295 = vunpack.c.l.b16 %v1236
        %v1296 = vunpack.c.l.b16 %v1240
        %v1297 = vunpack.c.l.b16 %v1243
        %v1298 = vunpack.c.l.b16 %v1247
        %v1299 = vunpack.c.l.b16 %v1250
        %v1300 = vunpack.c.l.b16 %v1254
        %v1301 = vunpack.c.l.b16 %v1257
        %v1302 = vunpack.c.l.b16 %v1261
        %v1303 = vunpack.c.l.b16 %v1264
        %v1304 = vunpack.c.l.b16 %v1268
        %v1305 = vunpack.c.l.b16 %v1271
        %v1306 = vpack.c.b16 %v1275, %v1274
        %v1307 = vpack.c.b16 %v1277, %v1276
        %v1308 = vpack.c.b16 %v1279, %v1278
        %v1309 = vpack.c.b16 %v1281, %v1280
        %v1310 = vpack.c.b16 %v1283, %v1282
        %v1311 = vpack.c.b16 %v1285, %v1284
        %v1312 = vpack.c.b16 %v1287, %v1286
        %v1313 = vpack.c.b16 %v1289, %v1288
        %v1314 = vpack.c.b16 %v1291, %v1290
        %v1315 = vpack.c.b16 %v1293, %v1292
        %v1316 = vpack.c.b16 %v1295, %v1294
        %v1317 = vpack.c.b16 %v1297, %v1296
        %v1318 = vpack.c.b16 %v1299, %v1298
        %v1319 = vpack.c.b16 %v1301, %v1300
        %v1320 = vpack.c.b16 %v1303, %v1302
        %v1321 = vpack.c.b16 %v1305, %v1304
        %v1323 = vsel %vm635, %v1306, 0
        %v1326 = vsel %vm635, %v1307, 0
        %v1329 = vsel %vm635, %v1308, 0
        %v1332 = vsel %vm635, %v1309, 0
        %v1335 = vsel %vm635, %v1310, 0
        %v1338 = vsel %vm635, %v1311, 0
        %v1341 = vsel %vm635, %v1312, 0
        %v1344 = vsel %vm635, %v1313, 0
        %v1347 = vsel %vm635, %v1314, 0
        %v1350 = vsel %vm635, %v1315, 0
        %v1353 = vsel %vm635, %v1316, 0
        %v1356 = vsel %vm635, %v1317, 0
        %v1359 = vsel %vm635, %v1318, 0
        %v1362 = vsel %vm635, %v1319, 0
        %v1365 = vsel %vm635, %v1320, 0
        %v1368 = vsel %vm635, %v1321, 0
        %v1371 = vsel %vm684, %v1273, 0
        %1373 = vmatprep.subr.bf16.mxu0 0
        %1374 = vmatpush1.bf16.msra.mxu0 0
        %1375 = vmatprep.subr.bf16.mxu0 0
        %1376 = vmatpush1.bf16.msra.mxu0 0
        %1377 = vmatprep.subr.bf16.mxu0 0
        %1378 = vmatpush1.bf16.msra.mxu0 0
        %1379 = vmatprep.subr.bf16.mxu0 0
        %1380 = vmatpush1.bf16.msra.mxu0 0
        %1381 = vmatprep.subr.bf16.mxu0 0
        %1382 = vmatpush1.bf16.msra.mxu0 0
        %1383 = vmatprep.subr.bf16.mxu0 0
        %1384 = vmatpush1.bf16.msra.mxu0 0
        %1385 = vmatprep.subr.bf16.mxu0 0
        %1386 = vmatpush1.bf16.msra.mxu0 0
        %1387 = vmatprep.subr.bf16.mxu0 0
        %1388 = vmatpush1.bf16.msra.mxu0 %v1371
        %1389 = vmatprep.subr.bf16.mxu0 0
        %1390 = vmatpush2.bf16.msra.mxu0 0
        %1391 = vmatprep.subr.bf16.mxu0 0
        %1392 = vmatpush2.bf16.msra.mxu0 0
        %1393 = vmatprep.subr.bf16.mxu0 0
        %1394 = vmatpush2.bf16.msra.mxu0 0
        %1395 = vmatprep.subr.bf16.mxu0 0
        %1396 = vmatpush2.bf16.msra.mxu0 0
        %1397 = vmatprep.subr.bf16.mxu0 0
        %1398 = vmatpush2.bf16.msra.mxu0 0
        %1399 = vmatprep.subr.bf16.mxu0 0
        %1400 = vmatpush2.bf16.msra.mxu0 0
        %1401 = vmatprep.subr.bf16.mxu0 0
        %1402 = vmatpush2.bf16.msra.mxu0 0
        %1403 = vmatprep.subr.bf16.mxu0 0
        %1404 = vmatpush2.bf16.msra.mxu0 0
        %1405 = vmatprep.mubr.bf16.mxu0 0
        %1406 = vmatmul.mubr.bf16.gmra.mxu0 %v1323
        %v1407 = vpop.f32.mrf.mxu0
        %v1408 = vadd.f32 0.0, %v1407
        %v1409 = vpop.f32.mrf.mxu0
        %v1410 = vpop.f32.mrf.mxu0
        %v1411 = vadd.f32 0.0, %v1410
        %v1412 = vpop.f32.mrf.mxu0
        %1413 = vmatprep.mubr.bf16.mxu0 0
        %1414 = vmatmul.mubr.bf16.gmra.mxu0 %v1326
        %v1415 = vpop.f32.mrf.mxu0
        %v1416 = vadd.f32 0.0, %v1415
        %v1417 = vpop.f32.mrf.mxu0
        %v1418 = vpop.f32.mrf.mxu0
        %v1419 = vadd.f32 0.0, %v1418
        %v1420 = vpop.f32.mrf.mxu0
        %1421 = vmatprep.mubr.bf16.mxu0 0
        %1422 = vmatmul.mubr.bf16.gmra.mxu0 %v1329
        %v1423 = vpop.f32.mrf.mxu0
        %v1424 = vadd.f32 0.0, %v1423
        %v1425 = vpop.f32.mrf.mxu0
        %v1426 = vpop.f32.mrf.mxu0
        %v1427 = vadd.f32 0.0, %v1426
        %v1428 = vpop.f32.mrf.mxu0
        %1429 = vmatprep.mubr.bf16.mxu0 0
        %1430 = vmatmul.mubr.bf16.gmra.mxu0 %v1332
        %v1431 = vpop.f32.mrf.mxu0
        %v1432 = vadd.f32 0.0, %v1431
        %v1433 = vpop.f32.mrf.mxu0
        %v1434 = vpop.f32.mrf.mxu0
        %v1435 = vadd.f32 0.0, %v1434
        %v1436 = vpop.f32.mrf.mxu0
        %1437 = vmatprep.mubr.bf16.mxu0 0
        %1438 = vmatmul.mubr.bf16.gmra.mxu0 %v1335
        %v1439 = vpop.f32.mrf.mxu0
        %v1440 = vadd.f32 0.0, %v1439
        %v1441 = vpop.f32.mrf.mxu0
        %v1442 = vpop.f32.mrf.mxu0
        %v1443 = vadd.f32 0.0, %v1442
        %v1444 = vpop.f32.mrf.mxu0
        %1445 = vmatprep.mubr.bf16.mxu0 0
        %1446 = vmatmul.mubr.bf16.gmra.mxu0 %v1338
        %v1447 = vpop.f32.mrf.mxu0
        %v1448 = vadd.f32 0.0, %v1447
        %v1449 = vpop.f32.mrf.mxu0
        %v1450 = vpop.f32.mrf.mxu0
        %v1451 = vadd.f32 0.0, %v1450
        %v1452 = vpop.f32.mrf.mxu0
        %1453 = vmatprep.mubr.bf16.mxu0 0
        %1454 = vmatmul.mubr.bf16.gmra.mxu0 %v1341
        %v1455 = vpop.f32.mrf.mxu0
        %v1456 = vadd.f32 0.0, %v1455
        %v1457 = vpop.f32.mrf.mxu0
        %v1458 = vpop.f32.mrf.mxu0
        %v1459 = vadd.f32 0.0, %v1458
        %v1460 = vpop.f32.mrf.mxu0
        %1461 = vmatprep.mubr.bf16.mxu0 0
        %1462 = vmatmul.mubr.bf16.gmra.mxu0 %v1344
        %v1463 = vpop.f32.mrf.mxu0
        %v1464 = vadd.f32 0.0, %v1463
        %v1465 = vpop.f32.mrf.mxu0
        %v1466 = vpop.f32.mrf.mxu0
        %v1467 = vadd.f32 0.0, %v1466
        %v1468 = vpop.f32.mrf.mxu0
        %1469 = vmatprep.mubr.bf16.mxu0 0
        %1470 = vmatmul.mubr.bf16.gmra.mxu0 %v1347
        %v1471 = vpop.f32.mrf.mxu0
        %v1472 = vadd.f32 0.0, %v1471
        %v1473 = vpop.f32.mrf.mxu0
        %v1474 = vpop.f32.mrf.mxu0
        %v1475 = vadd.f32 0.0, %v1474
        %v1476 = vpop.f32.mrf.mxu0
        %1477 = vmatprep.mubr.bf16.mxu0 0
        %1478 = vmatmul.mubr.bf16.gmra.mxu0 %v1350
        %v1479 = vpop.f32.mrf.mxu0
        %v1480 = vadd.f32 0.0, %v1479
        %v1481 = vpop.f32.mrf.mxu0
        %v1482 = vpop.f32.mrf.mxu0
        %v1483 = vadd.f32 0.0, %v1482
        %v1484 = vpop.f32.mrf.mxu0
        %1485 = vmatprep.mubr.bf16.mxu0 0
        %1486 = vmatmul.mubr.bf16.gmra.mxu0 %v1353
        %v1487 = vpop.f32.mrf.mxu0
        %v1488 = vadd.f32 0.0, %v1487
        %v1489 = vpop.f32.mrf.mxu0
        %v1490 = vpop.f32.mrf.mxu0
        %v1491 = vadd.f32 0.0, %v1490
        %v1492 = vpop.f32.mrf.mxu0
        %1493 = vmatprep.mubr.bf16.mxu0 0
        %1494 = vmatmul.mubr.bf16.gmra.mxu0 %v1356
        %v1495 = vpop.f32.mrf.mxu0
        %v1496 = vadd.f32 0.0, %v1495
        %v1497 = vpop.f32.mrf.mxu0
        %v1498 = vpop.f32.mrf.mxu0
        %v1499 = vadd.f32 0.0, %v1498
        %v1500 = vpop.f32.mrf.mxu0
        %1501 = vmatprep.mubr.bf16.mxu0 0
        %1502 = vmatmul.mubr.bf16.gmra.mxu0 %v1359
        %v1503 = vpop.f32.mrf.mxu0
        %v1504 = vadd.f32 0.0, %v1503
        %v1505 = vpop.f32.mrf.mxu0
        %v1506 = vpop.f32.mrf.mxu0
        %v1507 = vadd.f32 0.0, %v1506
        %v1508 = vpop.f32.mrf.mxu0
        %1509 = vmatprep.mubr.bf16.mxu0 0
        %1510 = vmatmul.mubr.bf16.gmra.mxu0 %v1362
        %v1511 = vpop.f32.mrf.mxu0
        %v1512 = vadd.f32 0.0, %v1511
        %v1513 = vpop.f32.mrf.mxu0
        %v1514 = vpop.f32.mrf.mxu0
        %v1515 = vadd.f32 0.0, %v1514
        %v1516 = vpop.f32.mrf.mxu0
        %1517 = vmatprep.mubr.bf16.mxu0 0
        %1518 = vmatmul.mubr.bf16.gmra.mxu0 %v1365
        %v1519 = vpop.f32.mrf.mxu0
        %v1520 = vadd.f32 0.0, %v1519
        %v1521 = vpop.f32.mrf.mxu0
        %v1522 = vpop.f32.mrf.mxu0
        %v1523 = vadd.f32 0.0, %v1522
        %v1524 = vpop.f32.mrf.mxu0
        %1525 = vmatprep.mubr.bf16.mxu0 0
        %1526 = vmatmul.mubr.bf16.gmra.mxu0 %v1368
        %v1527 = vpop.f32.mrf.mxu0
        %v1528 = vadd.f32 0.0, %v1527
        %v1529 = vpop.f32.mrf.mxu0
        %v1530 = vpop.f32.mrf.mxu0
        %v1531 = vadd.f32 0.0, %v1530
        %v1532 = vpop.f32.mrf.mxu0
        %1533 = vdwg.mxu0
        %v1534 = vadd.f32 %v1015, %v1408
        %v1535 = vadd.f32 %v1018, %v1411
        %v1536 = vadd.f32 %v1023, %v1416
        %v1537 = vadd.f32 %v1026, %v1419
        %v1538 = vadd.f32 %v1031, %v1424
        %v1539 = vadd.f32 %v1034, %v1427
        %v1540 = vadd.f32 %v1039, %v1432
        %v1541 = vadd.f32 %v1042, %v1435
        %v1542 = vadd.f32 %v1047, %v1440
        %v1543 = vadd.f32 %v1050, %v1443
        %v1544 = vadd.f32 %v1055, %v1448
        %v1545 = vadd.f32 %v1058, %v1451
        %v1546 = vadd.f32 %v1063, %v1456
        %v1547 = vadd.f32 %v1066, %v1459
        %v1548 = vadd.f32 %v1071, %v1464
        %v1549 = vadd.f32 %v1074, %v1467
        %v1550 = vadd.f32 %v1079, %v1472
        %v1551 = vadd.f32 %v1082, %v1475
        %v1552 = vadd.f32 %v1087, %v1480
        %v1553 = vadd.f32 %v1090, %v1483
        %v1554 = vadd.f32 %v1095, %v1488
        %v1555 = vadd.f32 %v1098, %v1491
        %v1556 = vadd.f32 %v1103, %v1496
        %v1557 = vadd.f32 %v1106, %v1499
        %v1558 = vadd.f32 %v1111, %v1504
        %v1559 = vadd.f32 %v1114, %v1507
        %v1560 = vadd.f32 %v1119, %v1512
        %v1561 = vadd.f32 %v1122, %v1515
        %v1562 = vadd.f32 %v1127, %v1520
        %v1563 = vadd.f32 %v1130, %v1523
        %v1564 = vadd.f32 %v1135, %v1528
        %v1565 = vadd.f32 %v1138, %v1531
        %s1566 = scalar_lea.vmem %s1, 6
        %v1567 = vld [vmem:[%s1566] sm:$0x3]
        %v1570 = vunpack.c.l.b16 %v191
        %v1571 = vunpack.c.l.b16 %v192
        %v1572 = vpack.c.b16 %v1571, %v1570
        %v1574 = vsel %vm635, %v1572, 0
        %v1577 = vsel %vm684, %v1567, 0
        %1579 = vmatprep.subr.bf16.mxu0 0
        %1580 = vmatpush1.bf16.msra.mxu0 0
        %1581 = vmatprep.subr.bf16.mxu0 0
        %1582 = vmatpush1.bf16.msra.mxu0 0
        %1583 = vmatprep.subr.bf16.mxu0 0
        %1584 = vmatpush1.bf16.msra.mxu0 0
        %1585 = vmatprep.subr.bf16.mxu0 0
        %1586 = vmatpush1.bf16.msra.mxu0 0
        %1587 = vmatprep.subr.bf16.mxu0 0
        %1588 = vmatpush1.bf16.msra.mxu0 0
        %1589 = vmatprep.subr.bf16.mxu0 0
        %1590 = vmatpush1.bf16.msra.mxu0 0
        %1591 = vmatprep.subr.bf16.mxu0 0
        %1592 = vmatpush1.bf16.msra.mxu0 0
        %1593 = vmatprep.subr.bf16.mxu0 0
        %1594 = vmatpush1.bf16.msra.mxu0 %v1577
        %1595 = vmatprep.subr.bf16.mxu0 0
        %1596 = vmatpush2.bf16.msra.mxu0 0
        %1597 = vmatprep.subr.bf16.mxu0 0
        %1598 = vmatpush2.bf16.msra.mxu0 0
        %1599 = vmatprep.subr.bf16.mxu0 0
        %1600 = vmatpush2.bf16.msra.mxu0 0
        %1601 = vmatprep.subr.bf16.mxu0 0
        %1602 = vmatpush2.bf16.msra.mxu0 0
        %1603 = vmatprep.subr.bf16.mxu0 0
        %1604 = vmatpush2.bf16.msra.mxu0 0
        %1605 = vmatprep.subr.bf16.mxu0 0
        %1606 = vmatpush2.bf16.msra.mxu0 0
        %1607 = vmatprep.subr.bf16.mxu0 0
        %1608 = vmatpush2.bf16.msra.mxu0 0
        %1609 = vmatprep.subr.bf16.mxu0 0
        %1610 = vmatpush2.bf16.msra.mxu0 0
        %1611 = vmatprep.mubr.bf16.mxu0 0
        %1612 = vmatmul.mubr.bf16.gmra.mxu0 %v933
        %v1613 = vpop.f32.mrf.mxu0
        %v1614 = vadd.f32 0.0, %v1613
        %v1615 = vpop.f32.mrf.mxu0
        %v1616 = vpop.f32.mrf.mxu0
        %v1617 = vadd.f32 0.0, %v1616
        %v1618 = vpop.f32.mrf.mxu0
        %1619 = vmatprep.mubr.bf16.mxu0 0
        %1620 = vmatmul.mubr.bf16.gmra.mxu0 %v936
        %v1621 = vpop.f32.mrf.mxu0
        %v1622 = vadd.f32 0.0, %v1621
        %v1623 = vpop.f32.mrf.mxu0
        %v1624 = vpop.f32.mrf.mxu0
        %v1625 = vadd.f32 0.0, %v1624
        %v1626 = vpop.f32.mrf.mxu0
        %1627 = vmatprep.mubr.bf16.mxu0 0
        %1628 = vmatmul.mubr.bf16.gmra.mxu0 %v939
        %v1629 = vpop.f32.mrf.mxu0
        %v1630 = vadd.f32 0.0, %v1629
        %v1631 = vpop.f32.mrf.mxu0
        %v1632 = vpop.f32.mrf.mxu0
        %v1633 = vadd.f32 0.0, %v1632
        %v1634 = vpop.f32.mrf.mxu0
        %1635 = vmatprep.mubr.bf16.mxu0 0
        %1636 = vmatmul.mubr.bf16.gmra.mxu0 %v942
        %v1637 = vpop.f32.mrf.mxu0
        %v1638 = vadd.f32 0.0, %v1637
        %v1639 = vpop.f32.mrf.mxu0
        %v1640 = vpop.f32.mrf.mxu0
        %v1641 = vadd.f32 0.0, %v1640
        %v1642 = vpop.f32.mrf.mxu0
        %1643 = vmatprep.mubr.bf16.mxu0 0
        %1644 = vmatmul.mubr.bf16.gmra.mxu0 %v945
        %v1645 = vpop.f32.mrf.mxu0
        %v1646 = vadd.f32 0.0, %v1645
        %v1647 = vpop.f32.mrf.mxu0
        %v1648 = vpop.f32.mrf.mxu0
        %v1649 = vadd.f32 0.0, %v1648
        %v1650 = vpop.f32.mrf.mxu0
        %1651 = vmatprep.mubr.bf16.mxu0 0
        %1652 = vmatmul.mubr.bf16.gmra.mxu0 %v948
        %v1653 = vpop.f32.mrf.mxu0
        %v1654 = vadd.f32 0.0, %v1653
        %v1655 = vpop.f32.mrf.mxu0
        %v1656 = vpop.f32.mrf.mxu0
        %v1657 = vadd.f32 0.0, %v1656
        %v1658 = vpop.f32.mrf.mxu0
        %1659 = vmatprep.mubr.bf16.mxu0 0
        %1660 = vmatmul.mubr.bf16.gmra.mxu0 %v951
        %v1661 = vpop.f32.mrf.mxu0
        %v1662 = vadd.f32 0.0, %v1661
        %v1663 = vpop.f32.mrf.mxu0
        %v1664 = vpop.f32.mrf.mxu0
        %v1665 = vadd.f32 0.0, %v1664
        %v1666 = vpop.f32.mrf.mxu0
        %1667 = vmatprep.mubr.bf16.mxu0 0
        %1668 = vmatmul.mubr.bf16.gmra.mxu0 %v954
        %v1669 = vpop.f32.mrf.mxu0
        %v1670 = vadd.f32 0.0, %v1669
        %v1671 = vpop.f32.mrf.mxu0
        %v1672 = vpop.f32.mrf.mxu0
        %v1673 = vadd.f32 0.0, %v1672
        %v1674 = vpop.f32.mrf.mxu0
        %1675 = vmatprep.mubr.bf16.mxu0 0
        %1676 = vmatmul.mubr.bf16.gmra.mxu0 %v957
        %v1677 = vpop.f32.mrf.mxu0
        %v1678 = vadd.f32 0.0, %v1677
        %v1679 = vpop.f32.mrf.mxu0
        %v1680 = vpop.f32.mrf.mxu0
        %v1681 = vadd.f32 0.0, %v1680
        %v1682 = vpop.f32.mrf.mxu0
        %1683 = vmatprep.mubr.bf16.mxu0 0
        %1684 = vmatmul.mubr.bf16.gmra.mxu0 %v960
        %v1685 = vpop.f32.mrf.mxu0
        %v1686 = vadd.f32 0.0, %v1685
        %v1687 = vpop.f32.mrf.mxu0
        %v1688 = vpop.f32.mrf.mxu0
        %v1689 = vadd.f32 0.0, %v1688
        %v1690 = vpop.f32.mrf.mxu0
        %1691 = vmatprep.mubr.bf16.mxu0 0
        %1692 = vmatmul.mubr.bf16.gmra.mxu0 %v963
        %v1693 = vpop.f32.mrf.mxu0
        %v1694 = vadd.f32 0.0, %v1693
        %v1695 = vpop.f32.mrf.mxu0
        %v1696 = vpop.f32.mrf.mxu0
        %v1697 = vadd.f32 0.0, %v1696
        %v1698 = vpop.f32.mrf.mxu0
        %1699 = vmatprep.mubr.bf16.mxu0 0
        %1700 = vmatmul.mubr.bf16.gmra.mxu0 %v966
        %v1701 = vpop.f32.mrf.mxu0
        %v1702 = vadd.f32 0.0, %v1701
        %v1703 = vpop.f32.mrf.mxu0
        %v1704 = vpop.f32.mrf.mxu0
        %v1705 = vadd.f32 0.0, %v1704
        %v1706 = vpop.f32.mrf.mxu0
        %1707 = vmatprep.mubr.bf16.mxu0 0
        %1708 = vmatmul.mubr.bf16.gmra.mxu0 %v969
        %v1709 = vpop.f32.mrf.mxu0
        %v1710 = vadd.f32 0.0, %v1709
        %v1711 = vpop.f32.mrf.mxu0
        %v1712 = vpop.f32.mrf.mxu0
        %v1713 = vadd.f32 0.0, %v1712
        %v1714 = vpop.f32.mrf.mxu0
        %1715 = vmatprep.mubr.bf16.mxu0 0
        %1716 = vmatmul.mubr.bf16.gmra.mxu0 %v972
        %v1717 = vpop.f32.mrf.mxu0
        %v1718 = vadd.f32 0.0, %v1717
        %v1719 = vpop.f32.mrf.mxu0
        %v1720 = vpop.f32.mrf.mxu0
        %v1721 = vadd.f32 0.0, %v1720
        %v1722 = vpop.f32.mrf.mxu0
        %1723 = vmatprep.mubr.bf16.mxu0 0
        %1724 = vmatmul.mubr.bf16.gmra.mxu0 %v975
        %v1725 = vpop.f32.mrf.mxu0
        %v1726 = vadd.f32 0.0, %v1725
        %v1727 = vpop.f32.mrf.mxu0
        %v1728 = vpop.f32.mrf.mxu0
        %v1729 = vadd.f32 0.0, %v1728
        %v1730 = vpop.f32.mrf.mxu0
        %1731 = vmatprep.mubr.bf16.mxu0 0
        %1732 = vmatmul.mubr.bf16.gmra.mxu0 %v1574
        %v1733 = vpop.f32.mrf.mxu0
        %v1734 = vadd.f32 0.0, %v1733
        %v1735 = vpop.f32.mrf.mxu0
        %v1736 = vpop.f32.mrf.mxu0
        %v1737 = vadd.f32 0.0, %v1736
        %v1738 = vpop.f32.mrf.mxu0
        %1739 = vdwg.mxu0
        %v1740 = vadd.f32 %v1534, %v1614
        %v1741 = vadd.f32 %v1535, %v1617
        %v1742 = vadd.f32 %v1536, %v1622
        %v1743 = vadd.f32 %v1537, %v1625
        %v1744 = vadd.f32 %v1538, %v1630
        %v1745 = vadd.f32 %v1539, %v1633
        %v1746 = vadd.f32 %v1540, %v1638
        %v1747 = vadd.f32 %v1541, %v1641
        %v1748 = vadd.f32 %v1542, %v1646
        %v1749 = vadd.f32 %v1543, %v1649
        %v1750 = vadd.f32 %v1544, %v1654
        %v1751 = vadd.f32 %v1545, %v1657
        %v1752 = vadd.f32 %v1546, %v1662
        %v1753 = vadd.f32 %v1547, %v1665
        %v1754 = vadd.f32 %v1548, %v1670
        %v1755 = vadd.f32 %v1549, %v1673
        %v1756 = vadd.f32 %v1550, %v1678
        %v1757 = vadd.f32 %v1551, %v1681
        %v1758 = vadd.f32 %v1552, %v1686
        %v1759 = vadd.f32 %v1553, %v1689
        %v1760 = vadd.f32 %v1554, %v1694
        %v1761 = vadd.f32 %v1555, %v1697
        %v1762 = vadd.f32 %v1556, %v1702
        %v1763 = vadd.f32 %v1557, %v1705
        %v1764 = vadd.f32 %v1558, %v1710
        %v1765 = vadd.f32 %v1559, %v1713
        %v1766 = vadd.f32 %v1560, %v1718
        %v1767 = vadd.f32 %v1561, %v1721
        %v1768 = vadd.f32 %v1562, %v1726
        %v1769 = vadd.f32 %v1563, %v1729
        %v1770 = vadd.f32 %v1564, %v1734
        %v1771 = vadd.f32 %v1565, %v1737
        %v1773 = vshrl.u32 %v191, 16
        %v1775 = vrot.slane %v1773, 4
        %v1776 = vshll.u32 %v191, 16
        %v1778 = vrot.slane %v1776, 5
        %v1779 = vor.u32 %v1775, %v1778
        %v1780 = vrot.slane %v1779, 4
        %v1782 = vshll.u32 %v192, 16
        %v1784 = vrot.slane %v1782, 5
        %v1785 = vsel %vm200, %v1780, %v1784
        %v1786 = vshrl.u32 %v192, 16
        %v1788 = vrot.slane %v1786, 4
        %v1789 = vor.u32 %v1788, %v1784
        %v1790 = vrot.slane %v1789, 4
        %v1792 = vshll.u32 %v193, 16
        %v1794 = vrot.slane %v1792, 5
        %v1795 = vsel %vm200, %v1790, %v1794
        %s1796 = scalar_lea.vmem %s1, 8
        %v1797 = vld [vmem:[%s1796] sm:$0x3]
        %v1798 = vunpack.c.l.b16 %v1785
        %v1799 = vunpack.c.l.b16 %v1795
        %v1800 = vpack.c.b16 %v1799, %v1798
        %v1802 = vsel %vm635, %v1800, 0
        %v1805 = vsel %vm684, %v1797, 0
        %1807 = vmatprep.subr.bf16.mxu0 0
        %1808 = vmatpush1.bf16.msra.mxu0 0
        %1809 = vmatprep.subr.bf16.mxu0 0
        %1810 = vmatpush1.bf16.msra.mxu0 0
        %1811 = vmatprep.subr.bf16.mxu0 0
        %1812 = vmatpush1.bf16.msra.mxu0 0
        %1813 = vmatprep.subr.bf16.mxu0 0
        %1814 = vmatpush1.bf16.msra.mxu0 0
        %1815 = vmatprep.subr.bf16.mxu0 0
        %1816 = vmatpush1.bf16.msra.mxu0 0
        %1817 = vmatprep.subr.bf16.mxu0 0
        %1818 = vmatpush1.bf16.msra.mxu0 0
        %1819 = vmatprep.subr.bf16.mxu0 0
        %1820 = vmatpush1.bf16.msra.mxu0 0
        %1821 = vmatprep.subr.bf16.mxu0 0
        %1822 = vmatpush1.bf16.msra.mxu0 %v1805
        %1823 = vmatprep.subr.bf16.mxu0 0
        %1824 = vmatpush2.bf16.msra.mxu0 0
        %1825 = vmatprep.subr.bf16.mxu0 0
        %1826 = vmatpush2.bf16.msra.mxu0 0
        %1827 = vmatprep.subr.bf16.mxu0 0
        %1828 = vmatpush2.bf16.msra.mxu0 0
        %1829 = vmatprep.subr.bf16.mxu0 0
        %1830 = vmatpush2.bf16.msra.mxu0 0
        %1831 = vmatprep.subr.bf16.mxu0 0
        %1832 = vmatpush2.bf16.msra.mxu0 0
        %1833 = vmatprep.subr.bf16.mxu0 0
        %1834 = vmatpush2.bf16.msra.mxu0 0
        %1835 = vmatprep.subr.bf16.mxu0 0
        %1836 = vmatpush2.bf16.msra.mxu0 0
        %1837 = vmatprep.subr.bf16.mxu0 0
        %1838 = vmatpush2.bf16.msra.mxu0 0
        %1839 = vmatprep.mubr.bf16.mxu0 0
        %1840 = vmatmul.mubr.bf16.gmra.mxu0 %v640
        %v1841 = vpop.f32.mrf.mxu0
        %v1842 = vadd.f32 0.0, %v1841
        %v1843 = vpop.f32.mrf.mxu0
        %v1844 = vpop.f32.mrf.mxu0
        %v1845 = vadd.f32 0.0, %v1844
        %v1846 = vpop.f32.mrf.mxu0
        %1847 = vmatprep.mubr.bf16.mxu0 0
        %1848 = vmatmul.mubr.bf16.gmra.mxu0 %v643
        %v1849 = vpop.f32.mrf.mxu0
        %v1850 = vadd.f32 0.0, %v1849
        %v1851 = vpop.f32.mrf.mxu0
        %v1852 = vpop.f32.mrf.mxu0
        %v1853 = vadd.f32 0.0, %v1852
        %v1854 = vpop.f32.mrf.mxu0
        %1855 = vmatprep.mubr.bf16.mxu0 0
        %1856 = vmatmul.mubr.bf16.gmra.mxu0 %v646
        %v1857 = vpop.f32.mrf.mxu0
        %v1858 = vadd.f32 0.0, %v1857
        %v1859 = vpop.f32.mrf.mxu0
        %v1860 = vpop.f32.mrf.mxu0
        %v1861 = vadd.f32 0.0, %v1860
        %v1862 = vpop.f32.mrf.mxu0
        %1863 = vmatprep.mubr.bf16.mxu0 0
        %1864 = vmatmul.mubr.bf16.gmra.mxu0 %v649
        %v1865 = vpop.f32.mrf.mxu0
        %v1866 = vadd.f32 0.0, %v1865
        %v1867 = vpop.f32.mrf.mxu0
        %v1868 = vpop.f32.mrf.mxu0
        %v1869 = vadd.f32 0.0, %v1868
        %v1870 = vpop.f32.mrf.mxu0
        %1871 = vmatprep.mubr.bf16.mxu0 0
        %1872 = vmatmul.mubr.bf16.gmra.mxu0 %v652
        %v1873 = vpop.f32.mrf.mxu0
        %v1874 = vadd.f32 0.0, %v1873
        %v1875 = vpop.f32.mrf.mxu0
        %v1876 = vpop.f32.mrf.mxu0
        %v1877 = vadd.f32 0.0, %v1876
        %v1878 = vpop.f32.mrf.mxu0
        %1879 = vmatprep.mubr.bf16.mxu0 0
        %1880 = vmatmul.mubr.bf16.gmra.mxu0 %v655
        %v1881 = vpop.f32.mrf.mxu0
        %v1882 = vadd.f32 0.0, %v1881
        %v1883 = vpop.f32.mrf.mxu0
        %v1884 = vpop.f32.mrf.mxu0
        %v1885 = vadd.f32 0.0, %v1884
        %v1886 = vpop.f32.mrf.mxu0
        %1887 = vmatprep.mubr.bf16.mxu0 0
        %1888 = vmatmul.mubr.bf16.gmra.mxu0 %v658
        %v1889 = vpop.f32.mrf.mxu0
        %v1890 = vadd.f32 0.0, %v1889
        %v1891 = vpop.f32.mrf.mxu0
        %v1892 = vpop.f32.mrf.mxu0
        %v1893 = vadd.f32 0.0, %v1892
        %v1894 = vpop.f32.mrf.mxu0
        %1895 = vmatprep.mubr.bf16.mxu0 0
        %1896 = vmatmul.mubr.bf16.gmra.mxu0 %v661
        %v1897 = vpop.f32.mrf.mxu0
        %v1898 = vadd.f32 0.0, %v1897
        %v1899 = vpop.f32.mrf.mxu0
        %v1900 = vpop.f32.mrf.mxu0
        %v1901 = vadd.f32 0.0, %v1900
        %v1902 = vpop.f32.mrf.mxu0
        %1903 = vmatprep.mubr.bf16.mxu0 0
        %1904 = vmatmul.mubr.bf16.gmra.mxu0 %v664
        %v1905 = vpop.f32.mrf.mxu0
        %v1906 = vadd.f32 0.0, %v1905
        %v1907 = vpop.f32.mrf.mxu0
        %v1908 = vpop.f32.mrf.mxu0
        %v1909 = vadd.f32 0.0, %v1908
        %v1910 = vpop.f32.mrf.mxu0
        %1911 = vmatprep.mubr.bf16.mxu0 0
        %1912 = vmatmul.mubr.bf16.gmra.mxu0 %v667
        %v1913 = vpop.f32.mrf.mxu0
        %v1914 = vadd.f32 0.0, %v1913
        %v1915 = vpop.f32.mrf.mxu0
        %v1916 = vpop.f32.mrf.mxu0
        %v1917 = vadd.f32 0.0, %v1916
        %v1918 = vpop.f32.mrf.mxu0
        %1919 = vmatprep.mubr.bf16.mxu0 0
        %1920 = vmatmul.mubr.bf16.gmra.mxu0 %v670
        %v1921 = vpop.f32.mrf.mxu0
        %v1922 = vadd.f32 0.0, %v1921
        %v1923 = vpop.f32.mrf.mxu0
        %v1924 = vpop.f32.mrf.mxu0
        %v1925 = vadd.f32 0.0, %v1924
        %v1926 = vpop.f32.mrf.mxu0
        %1927 = vmatprep.mubr.bf16.mxu0 0
        %1928 = vmatmul.mubr.bf16.gmra.mxu0 %v673
        %v1929 = vpop.f32.mrf.mxu0
        %v1930 = vadd.f32 0.0, %v1929
        %v1931 = vpop.f32.mrf.mxu0
        %v1932 = vpop.f32.mrf.mxu0
        %v1933 = vadd.f32 0.0, %v1932
        %v1934 = vpop.f32.mrf.mxu0
        %1935 = vmatprep.mubr.bf16.mxu0 0
        %1936 = vmatmul.mubr.bf16.gmra.mxu0 %v676
        %v1937 = vpop.f32.mrf.mxu0
        %v1938 = vadd.f32 0.0, %v1937
        %v1939 = vpop.f32.mrf.mxu0
        %v1940 = vpop.f32.mrf.mxu0
        %v1941 = vadd.f32 0.0, %v1940
        %v1942 = vpop.f32.mrf.mxu0
        %1943 = vmatprep.mubr.bf16.mxu0 0
        %1944 = vmatmul.mubr.bf16.gmra.mxu0 %v679
        %v1945 = vpop.f32.mrf.mxu0
        %v1946 = vadd.f32 0.0, %v1945
        %v1947 = vpop.f32.mrf.mxu0
        %v1948 = vpop.f32.mrf.mxu0
        %v1949 = vadd.f32 0.0, %v1948
        %v1950 = vpop.f32.mrf.mxu0
        %1951 = vmatprep.mubr.bf16.mxu0 0
        %1952 = vmatmul.mubr.bf16.gmra.mxu0 %v682
        %v1953 = vpop.f32.mrf.mxu0
        %v1954 = vadd.f32 0.0, %v1953
        %v1955 = vpop.f32.mrf.mxu0
        %v1956 = vpop.f32.mrf.mxu0
        %v1957 = vadd.f32 0.0, %v1956
        %v1958 = vpop.f32.mrf.mxu0
        %1959 = vmatprep.mubr.bf16.mxu0 0
        %1960 = vmatmul.mubr.bf16.gmra.mxu0 %v1802
        %v1961 = vpop.f32.mrf.mxu0
        %v1962 = vadd.f32 0.0, %v1961
        %v1963 = vpop.f32.mrf.mxu0
        %v1964 = vpop.f32.mrf.mxu0
        %v1965 = vadd.f32 0.0, %v1964
        %v1966 = vpop.f32.mrf.mxu0
        %1967 = vdwg.mxu0
        %v1968 = vadd.f32 %v1740, %v1842
        %v1969 = vadd.f32 %v1741, %v1845
        %v1970 = vadd.f32 %v1742, %v1850
        %v1971 = vadd.f32 %v1743, %v1853
        %v1972 = vadd.f32 %v1744, %v1858
        %v1973 = vadd.f32 %v1745, %v1861
        %v1974 = vadd.f32 %v1746, %v1866
        %v1975 = vadd.f32 %v1747, %v1869
        %v1976 = vadd.f32 %v1748, %v1874
        %v1977 = vadd.f32 %v1749, %v1877
        %v1978 = vadd.f32 %v1750, %v1882
        %v1979 = vadd.f32 %v1751, %v1885
        %v1980 = vadd.f32 %v1752, %v1890
        %v1981 = vadd.f32 %v1753, %v1893
        %v1982 = vadd.f32 %v1754, %v1898
        %v1983 = vadd.f32 %v1755, %v1901
        %v1984 = vadd.f32 %v1756, %v1906
        %v1985 = vadd.f32 %v1757, %v1909
        %v1986 = vadd.f32 %v1758, %v1914
        %v1987 = vadd.f32 %v1759, %v1917
        %v1988 = vadd.f32 %v1760, %v1922
        %v1989 = vadd.f32 %v1761, %v1925
        %v1990 = vadd.f32 %v1762, %v1930
        %v1991 = vadd.f32 %v1763, %v1933
        %v1992 = vadd.f32 %v1764, %v1938
        %v1993 = vadd.f32 %v1765, %v1941
        %v1994 = vadd.f32 %v1766, %v1946
        %v1995 = vadd.f32 %v1767, %v1949
        %v1996 = vadd.f32 %v1768, %v1954
        %v1997 = vadd.f32 %v1769, %v1957
        %v1998 = vadd.f32 %v1770, %v1962
        %v1999 = vadd.f32 %v1771, %v1965
        %v2001 = vrot.slane %v191, 5
        %v2002 = vrot.slane %v2001, 4
        %v2003 = vrot.slane %v192, 5
        %v2004 = vsel %vm1159, %v2002, %v2003
        %v2005 = vrot.slane %v2003, 4
        %v2006 = vrot.slane %v193, 5
        %v2007 = vsel %vm1159, %v2005, %v2006
        %s2008 = scalar_lea.vmem %s1, 10
        %v2009 = vld [vmem:[%s2008] sm:$0x3]
        %v2010 = vunpack.c.l.b16 %v2004
        %v2011 = vunpack.c.l.b16 %v2007
        %v2012 = vpack.c.b16 %v2011, %v2010
        %v2014 = vsel %vm635, %v2012, 0
        %v2017 = vsel %vm684, %v2009, 0
        %2019 = vmatprep.subr.bf16.mxu0 0
        %2020 = vmatpush1.bf16.msra.mxu0 0
        %2021 = vmatprep.subr.bf16.mxu0 0
        %2022 = vmatpush1.bf16.msra.mxu0 0
        %2023 = vmatprep.subr.bf16.mxu0 0
        %2024 = vmatpush1.bf16.msra.mxu0 0
        %2025 = vmatprep.subr.bf16.mxu0 0
        %2026 = vmatpush1.bf16.msra.mxu0 0
        %2027 = vmatprep.subr.bf16.mxu0 0
        %2028 = vmatpush1.bf16.msra.mxu0 0
        %2029 = vmatprep.subr.bf16.mxu0 0
        %2030 = vmatpush1.bf16.msra.mxu0 0
        %2031 = vmatprep.subr.bf16.mxu0 0
        %2032 = vmatpush1.bf16.msra.mxu0 0
        %2033 = vmatprep.subr.bf16.mxu0 0
        %2034 = vmatpush1.bf16.msra.mxu0 %v2017
        %2035 = vmatprep.subr.bf16.mxu0 0
        %2036 = vmatpush2.bf16.msra.mxu0 0
        %2037 = vmatprep.subr.bf16.mxu0 0
        %2038 = vmatpush2.bf16.msra.mxu0 0
        %2039 = vmatprep.subr.bf16.mxu0 0
        %2040 = vmatpush2.bf16.msra.mxu0 0
        %2041 = vmatprep.subr.bf16.mxu0 0
        %2042 = vmatpush2.bf16.msra.mxu0 0
        %2043 = vmatprep.subr.bf16.mxu0 0
        %2044 = vmatpush2.bf16.msra.mxu0 0
        %2045 = vmatprep.subr.bf16.mxu0 0
        %2046 = vmatpush2.bf16.msra.mxu0 0
        %2047 = vmatprep.subr.bf16.mxu0 0
        %2048 = vmatpush2.bf16.msra.mxu0 0
        %2049 = vmatprep.subr.bf16.mxu0 0
        %2050 = vmatpush2.bf16.msra.mxu0 0
        %2051 = vmatprep.mubr.bf16.mxu0 0
        %2052 = vmatmul.mubr.bf16.gmra.mxu0 %v1326
        %v2053 = vpop.f32.mrf.mxu0
        %v2054 = vadd.f32 0.0, %v2053
        %v2055 = vpop.f32.mrf.mxu0
        %v2056 = vpop.f32.mrf.mxu0
        %v2057 = vadd.f32 0.0, %v2056
        %v2058 = vpop.f32.mrf.mxu0
        %2059 = vmatprep.mubr.bf16.mxu0 0
        %2060 = vmatmul.mubr.bf16.gmra.mxu0 %v1329
        %v2061 = vpop.f32.mrf.mxu0
        %v2062 = vadd.f32 0.0, %v2061
        %v2063 = vpop.f32.mrf.mxu0
        %v2064 = vpop.f32.mrf.mxu0
        %v2065 = vadd.f32 0.0, %v2064
        %v2066 = vpop.f32.mrf.mxu0
        %2067 = vmatprep.mubr.bf16.mxu0 0
        %2068 = vmatmul.mubr.bf16.gmra.mxu0 %v1332
        %v2069 = vpop.f32.mrf.mxu0
        %v2070 = vadd.f32 0.0, %v2069
        %v2071 = vpop.f32.mrf.mxu0
        %v2072 = vpop.f32.mrf.mxu0
        %v2073 = vadd.f32 0.0, %v2072
        %v2074 = vpop.f32.mrf.mxu0
        %2075 = vmatprep.mubr.bf16.mxu0 0
        %2076 = vmatmul.mubr.bf16.gmra.mxu0 %v1335
        %v2077 = vpop.f32.mrf.mxu0
        %v2078 = vadd.f32 0.0, %v2077
        %v2079 = vpop.f32.mrf.mxu0
        %v2080 = vpop.f32.mrf.mxu0
        %v2081 = vadd.f32 0.0, %v2080
        %v2082 = vpop.f32.mrf.mxu0
        %2083 = vmatprep.mubr.bf16.mxu0 0
        %2084 = vmatmul.mubr.bf16.gmra.mxu0 %v1338
        %v2085 = vpop.f32.mrf.mxu0
        %v2086 = vadd.f32 0.0, %v2085
        %v2087 = vpop.f32.mrf.mxu0
        %v2088 = vpop.f32.mrf.mxu0
        %v2089 = vadd.f32 0.0, %v2088
        %v2090 = vpop.f32.mrf.mxu0
        %2091 = vmatprep.mubr.bf16.mxu0 0
        %2092 = vmatmul.mubr.bf16.gmra.mxu0 %v1341
        %v2093 = vpop.f32.mrf.mxu0
        %v2094 = vadd.f32 0.0, %v2093
        %v2095 = vpop.f32.mrf.mxu0
        %v2096 = vpop.f32.mrf.mxu0
        %v2097 = vadd.f32 0.0, %v2096
        %v2098 = vpop.f32.mrf.mxu0
        %2099 = vmatprep.mubr.bf16.mxu0 0
        %2100 = vmatmul.mubr.bf16.gmra.mxu0 %v1344
        %v2101 = vpop.f32.mrf.mxu0
        %v2102 = vadd.f32 0.0, %v2101
        %v2103 = vpop.f32.mrf.mxu0
        %v2104 = vpop.f32.mrf.mxu0
        %v2105 = vadd.f32 0.0, %v2104
        %v2106 = vpop.f32.mrf.mxu0
        %2107 = vmatprep.mubr.bf16.mxu0 0
        %2108 = vmatmul.mubr.bf16.gmra.mxu0 %v1347
        %v2109 = vpop.f32.mrf.mxu0
        %v2110 = vadd.f32 0.0, %v2109
        %v2111 = vpop.f32.mrf.mxu0
        %v2112 = vpop.f32.mrf.mxu0
        %v2113 = vadd.f32 0.0, %v2112
        %v2114 = vpop.f32.mrf.mxu0
        %2115 = vmatprep.mubr.bf16.mxu0 0
        %2116 = vmatmul.mubr.bf16.gmra.mxu0 %v1350
        %v2117 = vpop.f32.mrf.mxu0
        %v2118 = vadd.f32 0.0, %v2117
        %v2119 = vpop.f32.mrf.mxu0
        %v2120 = vpop.f32.mrf.mxu0
        %v2121 = vadd.f32 0.0, %v2120
        %v2122 = vpop.f32.mrf.mxu0
        %2123 = vmatprep.mubr.bf16.mxu0 0
        %2124 = vmatmul.mubr.bf16.gmra.mxu0 %v1353
        %v2125 = vpop.f32.mrf.mxu0
        %v2126 = vadd.f32 0.0, %v2125
        %v2127 = vpop.f32.mrf.mxu0
        %v2128 = vpop.f32.mrf.mxu0
        %v2129 = vadd.f32 0.0, %v2128
        %v2130 = vpop.f32.mrf.mxu0
        %2131 = vmatprep.mubr.bf16.mxu0 0
        %2132 = vmatmul.mubr.bf16.gmra.mxu0 %v1356
        %v2133 = vpop.f32.mrf.mxu0
        %v2134 = vadd.f32 0.0, %v2133
        %v2135 = vpop.f32.mrf.mxu0
        %v2136 = vpop.f32.mrf.mxu0
        %v2137 = vadd.f32 0.0, %v2136
        %v2138 = vpop.f32.mrf.mxu0
        %2139 = vmatprep.mubr.bf16.mxu0 0
        %2140 = vmatmul.mubr.bf16.gmra.mxu0 %v1359
        %v2141 = vpop.f32.mrf.mxu0
        %v2142 = vadd.f32 0.0, %v2141
        %v2143 = vpop.f32.mrf.mxu0
        %v2144 = vpop.f32.mrf.mxu0
        %v2145 = vadd.f32 0.0, %v2144
        %v2146 = vpop.f32.mrf.mxu0
        %2147 = vmatprep.mubr.bf16.mxu0 0
        %2148 = vmatmul.mubr.bf16.gmra.mxu0 %v1362
        %v2149 = vpop.f32.mrf.mxu0
        %v2150 = vadd.f32 0.0, %v2149
        %v2151 = vpop.f32.mrf.mxu0
        %v2152 = vpop.f32.mrf.mxu0
        %v2153 = vadd.f32 0.0, %v2152
        %v2154 = vpop.f32.mrf.mxu0
        %2155 = vmatprep.mubr.bf16.mxu0 0
        %2156 = vmatmul.mubr.bf16.gmra.mxu0 %v1365
        %v2157 = vpop.f32.mrf.mxu0
        %v2158 = vadd.f32 0.0, %v2157
        %v2159 = vpop.f32.mrf.mxu0
        %v2160 = vpop.f32.mrf.mxu0
        %v2161 = vadd.f32 0.0, %v2160
        %v2162 = vpop.f32.mrf.mxu0
        %2163 = vmatprep.mubr.bf16.mxu0 0
        %2164 = vmatmul.mubr.bf16.gmra.mxu0 %v1368
        %v2165 = vpop.f32.mrf.mxu0
        %v2166 = vadd.f32 0.0, %v2165
        %v2167 = vpop.f32.mrf.mxu0
        %v2168 = vpop.f32.mrf.mxu0
        %v2169 = vadd.f32 0.0, %v2168
        %v2170 = vpop.f32.mrf.mxu0
        %2171 = vmatprep.mubr.bf16.mxu0 0
        %2172 = vmatmul.mubr.bf16.gmra.mxu0 %v2014
        %v2173 = vpop.f32.mrf.mxu0
        %v2174 = vadd.f32 0.0, %v2173
        %v2175 = vpop.f32.mrf.mxu0
        %v2176 = vpop.f32.mrf.mxu0
        %v2177 = vadd.f32 0.0, %v2176
        %v2178 = vpop.f32.mrf.mxu0
        %2179 = vdwg.mxu0
        %v2180 = vadd.f32 %v1968, %v2054
        %v2181 = vadd.f32 %v1969, %v2057
        %v2182 = vadd.f32 %v1970, %v2062
        %v2183 = vadd.f32 %v1971, %v2065
        %v2184 = vadd.f32 %v1972, %v2070
        %v2185 = vadd.f32 %v1973, %v2073
        %v2186 = vadd.f32 %v1974, %v2078
        %v2187 = vadd.f32 %v1975, %v2081
        %v2188 = vadd.f32 %v1976, %v2086
        %v2189 = vadd.f32 %v1977, %v2089
        %v2190 = vadd.f32 %v1978, %v2094
        %v2191 = vadd.f32 %v1979, %v2097
        %v2192 = vadd.f32 %v1980, %v2102
        %v2193 = vadd.f32 %v1981, %v2105
        %v2194 = vadd.f32 %v1982, %v2110
        %v2195 = vadd.f32 %v1983, %v2113
        %v2196 = vadd.f32 %v1984, %v2118
        %v2197 = vadd.f32 %v1985, %v2121
        %v2198 = vadd.f32 %v1986, %v2126
        %v2199 = vadd.f32 %v1987, %v2129
        %v2200 = vadd.f32 %v1988, %v2134
        %v2201 = vadd.f32 %v1989, %v2137
        %v2202 = vadd.f32 %v1990, %v2142
        %v2203 = vadd.f32 %v1991, %v2145
        %v2204 = vadd.f32 %v1992, %v2150
        %v2205 = vadd.f32 %v1993, %v2153
        %v2206 = vadd.f32 %v1994, %v2158
        %v2207 = vadd.f32 %v1995, %v2161
        %v2208 = vadd.f32 %v1996, %v2166
        %v2209 = vadd.f32 %v1997, %v2169
        %v2210 = vadd.f32 %v1998, %v2174
        %v2211 = vadd.f32 %v1999, %v2177
        %s2212 = scalar_lea.vmem %s1, 12
        %v2213 = vld [vmem:[%s2212] sm:$0x3]
        %v2216 = vunpack.c.l.b16 %v194
        %v2217 = vunpack.c.l.b16 %v195
        %v2218 = vpack.c.b16 %v2217, %v2216
        %v2220 = vsel %vm635, %v2218, 0
        %v2223 = vsel %vm684, %v2213, 0
        %2225 = vmatprep.subr.bf16.mxu0 0
        %2226 = vmatpush1.bf16.msra.mxu0 0
        %2227 = vmatprep.subr.bf16.mxu0 0
        %2228 = vmatpush1.bf16.msra.mxu0 0
        %2229 = vmatprep.subr.bf16.mxu0 0
        %2230 = vmatpush1.bf16.msra.mxu0 0
        %2231 = vmatprep.subr.bf16.mxu0 0
        %2232 = vmatpush1.bf16.msra.mxu0 0
        %2233 = vmatprep.subr.bf16.mxu0 0
        %2234 = vmatpush1.bf16.msra.mxu0 0
        %2235 = vmatprep.subr.bf16.mxu0 0
        %2236 = vmatpush1.bf16.msra.mxu0 0
        %2237 = vmatprep.subr.bf16.mxu0 0
        %2238 = vmatpush1.bf16.msra.mxu0 0
        %2239 = vmatprep.subr.bf16.mxu0 0
        %2240 = vmatpush1.bf16.msra.mxu0 %v2223
        %2241 = vmatprep.subr.bf16.mxu0 0
        %2242 = vmatpush2.bf16.msra.mxu0 0
        %2243 = vmatprep.subr.bf16.mxu0 0
        %2244 = vmatpush2.bf16.msra.mxu0 0
        %2245 = vmatprep.subr.bf16.mxu0 0
        %2246 = vmatpush2.bf16.msra.mxu0 0
        %2247 = vmatprep.subr.bf16.mxu0 0
        %2248 = vmatpush2.bf16.msra.mxu0 0
        %2249 = vmatprep.subr.bf16.mxu0 0
        %2250 = vmatpush2.bf16.msra.mxu0 0
        %2251 = vmatprep.subr.bf16.mxu0 0
        %2252 = vmatpush2.bf16.msra.mxu0 0
        %2253 = vmatprep.subr.bf16.mxu0 0
        %2254 = vmatpush2.bf16.msra.mxu0 0
        %2255 = vmatprep.subr.bf16.mxu0 0
        %2256 = vmatpush2.bf16.msra.mxu0 0
        %2257 = vmatprep.mubr.bf16.mxu0 0
        %2258 = vmatmul.mubr.bf16.gmra.mxu0 %v936
        %v2259 = vpop.f32.mrf.mxu0
        %v2260 = vadd.f32 0.0, %v2259
        %v2261 = vpop.f32.mrf.mxu0
        %v2262 = vpop.f32.mrf.mxu0
        %v2263 = vadd.f32 0.0, %v2262
        %v2264 = vpop.f32.mrf.mxu0
        %2265 = vmatprep.mubr.bf16.mxu0 0
        %2266 = vmatmul.mubr.bf16.gmra.mxu0 %v939
        %v2267 = vpop.f32.mrf.mxu0
        %v2268 = vadd.f32 0.0, %v2267
        %v2269 = vpop.f32.mrf.mxu0
        %v2270 = vpop.f32.mrf.mxu0
        %v2271 = vadd.f32 0.0, %v2270
        %v2272 = vpop.f32.mrf.mxu0
        %2273 = vmatprep.mubr.bf16.mxu0 0
        %2274 = vmatmul.mubr.bf16.gmra.mxu0 %v942
        %v2275 = vpop.f32.mrf.mxu0
        %v2276 = vadd.f32 0.0, %v2275
        %v2277 = vpop.f32.mrf.mxu0
        %v2278 = vpop.f32.mrf.mxu0
        %v2279 = vadd.f32 0.0, %v2278
        %v2280 = vpop.f32.mrf.mxu0
        %2281 = vmatprep.mubr.bf16.mxu0 0
        %2282 = vmatmul.mubr.bf16.gmra.mxu0 %v945
        %v2283 = vpop.f32.mrf.mxu0
        %v2284 = vadd.f32 0.0, %v2283
        %v2285 = vpop.f32.mrf.mxu0
        %v2286 = vpop.f32.mrf.mxu0
        %v2287 = vadd.f32 0.0, %v2286
        %v2288 = vpop.f32.mrf.mxu0
        %2289 = vmatprep.mubr.bf16.mxu0 0
        %2290 = vmatmul.mubr.bf16.gmra.mxu0 %v948
        %v2291 = vpop.f32.mrf.mxu0
        %v2292 = vadd.f32 0.0, %v2291
        %v2293 = vpop.f32.mrf.mxu0
        %v2294 = vpop.f32.mrf.mxu0
        %v2295 = vadd.f32 0.0, %v2294
        %v2296 = vpop.f32.mrf.mxu0
        %2297 = vmatprep.mubr.bf16.mxu0 0
        %2298 = vmatmul.mubr.bf16.gmra.mxu0 %v951
        %v2299 = vpop.f32.mrf.mxu0
        %v2300 = vadd.f32 0.0, %v2299
        %v2301 = vpop.f32.mrf.mxu0
        %v2302 = vpop.f32.mrf.mxu0
        %v2303 = vadd.f32 0.0, %v2302
        %v2304 = vpop.f32.mrf.mxu0
        %2305 = vmatprep.mubr.bf16.mxu0 0
        %2306 = vmatmul.mubr.bf16.gmra.mxu0 %v954
        %v2307 = vpop.f32.mrf.mxu0
        %v2308 = vadd.f32 0.0, %v2307
        %v2309 = vpop.f32.mrf.mxu0
        %v2310 = vpop.f32.mrf.mxu0
        %v2311 = vadd.f32 0.0, %v2310
        %v2312 = vpop.f32.mrf.mxu0
        %2313 = vmatprep.mubr.bf16.mxu0 0
        %2314 = vmatmul.mubr.bf16.gmra.mxu0 %v957
        %v2315 = vpop.f32.mrf.mxu0
        %v2316 = vadd.f32 0.0, %v2315
        %v2317 = vpop.f32.mrf.mxu0
        %v2318 = vpop.f32.mrf.mxu0
        %v2319 = vadd.f32 0.0, %v2318
        %v2320 = vpop.f32.mrf.mxu0
        %2321 = vmatprep.mubr.bf16.mxu0 0
        %2322 = vmatmul.mubr.bf16.gmra.mxu0 %v960
        %v2323 = vpop.f32.mrf.mxu0
        %v2324 = vadd.f32 0.0, %v2323
        %v2325 = vpop.f32.mrf.mxu0
        %v2326 = vpop.f32.mrf.mxu0
        %v2327 = vadd.f32 0.0, %v2326
        %v2328 = vpop.f32.mrf.mxu0
        %2329 = vmatprep.mubr.bf16.mxu0 0
        %2330 = vmatmul.mubr.bf16.gmra.mxu0 %v963
        %v2331 = vpop.f32.mrf.mxu0
        %v2332 = vadd.f32 0.0, %v2331
        %v2333 = vpop.f32.mrf.mxu0
        %v2334 = vpop.f32.mrf.mxu0
        %v2335 = vadd.f32 0.0, %v2334
        %v2336 = vpop.f32.mrf.mxu0
        %2337 = vmatprep.mubr.bf16.mxu0 0
        %2338 = vmatmul.mubr.bf16.gmra.mxu0 %v966
        %v2339 = vpop.f32.mrf.mxu0
        %v2340 = vadd.f32 0.0, %v2339
        %v2341 = vpop.f32.mrf.mxu0
        %v2342 = vpop.f32.mrf.mxu0
        %v2343 = vadd.f32 0.0, %v2342
        %v2344 = vpop.f32.mrf.mxu0
        %2345 = vmatprep.mubr.bf16.mxu0 0
        %2346 = vmatmul.mubr.bf16.gmra.mxu0 %v969
        %v2347 = vpop.f32.mrf.mxu0
        %v2348 = vadd.f32 0.0, %v2347
        %v2349 = vpop.f32.mrf.mxu0
        %v2350 = vpop.f32.mrf.mxu0
        %v2351 = vadd.f32 0.0, %v2350
        %v2352 = vpop.f32.mrf.mxu0
        %2353 = vmatprep.mubr.bf16.mxu0 0
        %2354 = vmatmul.mubr.bf16.gmra.mxu0 %v972
        %v2355 = vpop.f32.mrf.mxu0
        %v2356 = vadd.f32 0.0, %v2355
        %v2357 = vpop.f32.mrf.mxu0
        %v2358 = vpop.f32.mrf.mxu0
        %v2359 = vadd.f32 0.0, %v2358
        %v2360 = vpop.f32.mrf.mxu0
        %2361 = vmatprep.mubr.bf16.mxu0 0
        %2362 = vmatmul.mubr.bf16.gmra.mxu0 %v975
        %v2363 = vpop.f32.mrf.mxu0
        %v2364 = vadd.f32 0.0, %v2363
        %v2365 = vpop.f32.mrf.mxu0
        %v2366 = vpop.f32.mrf.mxu0
        %v2367 = vadd.f32 0.0, %v2366
        %v2368 = vpop.f32.mrf.mxu0
        %2369 = vmatprep.mubr.bf16.mxu0 0
        %2370 = vmatmul.mubr.bf16.gmra.mxu0 %v1574
        %v2371 = vpop.f32.mrf.mxu0
        %v2372 = vadd.f32 0.0, %v2371
        %v2373 = vpop.f32.mrf.mxu0
        %v2374 = vpop.f32.mrf.mxu0
        %v2375 = vadd.f32 0.0, %v2374
        %v2376 = vpop.f32.mrf.mxu0
        %2377 = vmatprep.mubr.bf16.mxu0 0
        %2378 = vmatmul.mubr.bf16.gmra.mxu0 %v2220
        %v2379 = vpop.f32.mrf.mxu0
        %v2380 = vadd.f32 0.0, %v2379
        %v2381 = vpop.f32.mrf.mxu0
        %v2382 = vpop.f32.mrf.mxu0
        %v2383 = vadd.f32 0.0, %v2382
        %v2384 = vpop.f32.mrf.mxu0
        %2385 = vdwg.mxu0
        %v2386 = vadd.f32 %v2180, %v2260
        %v2387 = vadd.f32 %v2181, %v2263
        %v2388 = vadd.f32 %v2182, %v2268
        %v2389 = vadd.f32 %v2183, %v2271
        %v2390 = vadd.f32 %v2184, %v2276
        %v2391 = vadd.f32 %v2185, %v2279
        %v2392 = vadd.f32 %v2186, %v2284
        %v2393 = vadd.f32 %v2187, %v2287
        %v2394 = vadd.f32 %v2188, %v2292
        %v2395 = vadd.f32 %v2189, %v2295
        %v2396 = vadd.f32 %v2190, %v2300
        %v2397 = vadd.f32 %v2191, %v2303
        %v2398 = vadd.f32 %v2192, %v2308
        %v2399 = vadd.f32 %v2193, %v2311
        %v2400 = vadd.f32 %v2194, %v2316
        %v2401 = vadd.f32 %v2195, %v2319
        %v2402 = vadd.f32 %v2196, %v2324
        %v2403 = vadd.f32 %v2197, %v2327
        %v2404 = vadd.f32 %v2198, %v2332
        %v2405 = vadd.f32 %v2199, %v2335
        %v2406 = vadd.f32 %v2200, %v2340
        %v2407 = vadd.f32 %v2201, %v2343
        %v2408 = vadd.f32 %v2202, %v2348
        %v2409 = vadd.f32 %v2203, %v2351
        %v2410 = vadd.f32 %v2204, %v2356
        %v2411 = vadd.f32 %v2205, %v2359
        %v2412 = vadd.f32 %v2206, %v2364
        %v2413 = vadd.f32 %v2207, %v2367
        %v2414 = vadd.f32 %v2208, %v2372
        %v2415 = vadd.f32 %v2209, %v2375
        %v2416 = vadd.f32 %v2210, %v2380
        %v2417 = vadd.f32 %v2211, %v2383
        %v2419 = vshrl.u32 %v194, 16
        %v2421 = vrot.slane %v2419, 4
        %v2422 = vshll.u32 %v194, 16
        %v2424 = vrot.slane %v2422, 5
        %v2425 = vor.u32 %v2421, %v2424
        %v2426 = vrot.slane %v2425, 4
        %v2428 = vshll.u32 %v195, 16
        %v2430 = vrot.slane %v2428, 5
        %v2431 = vsel %vm200, %v2426, %v2430
        %v2432 = vshrl.u32 %v195, 16
        %v2434 = vrot.slane %v2432, 4
        %v2435 = vor.u32 %v2434, %v2430
        %v2436 = vrot.slane %v2435, 4
        %v2438 = vshll.u32 %v196, 16
        %v2440 = vrot.slane %v2438, 5
        %v2441 = vsel %vm200, %v2436, %v2440
        %s2442 = scalar_lea.vmem %s1, 14
        %v2443 = vld [vmem:[%s2442] sm:$0x3]
        %v2444 = vunpack.c.l.b16 %v2431
        %v2445 = vunpack.c.l.b16 %v2441
        %v2446 = vpack.c.b16 %v2445, %v2444
        %v2448 = vsel %vm635, %v2446, 0
        %v2451 = vsel %vm684, %v2443, 0
        %2453 = vmatprep.subr.bf16.mxu0 0
        %2454 = vmatpush1.bf16.msra.mxu0 0
        %2455 = vmatprep.subr.bf16.mxu0 0
        %2456 = vmatpush1.bf16.msra.mxu0 0
        %2457 = vmatprep.subr.bf16.mxu0 0
        %2458 = vmatpush1.bf16.msra.mxu0 0
        %2459 = vmatprep.subr.bf16.mxu0 0
        %2460 = vmatpush1.bf16.msra.mxu0 0
        %2461 = vmatprep.subr.bf16.mxu0 0
        %2462 = vmatpush1.bf16.msra.mxu0 0
        %2463 = vmatprep.subr.bf16.mxu0 0
        %2464 = vmatpush1.bf16.msra.mxu0 0
        %2465 = vmatprep.subr.bf16.mxu0 0
        %2466 = vmatpush1.bf16.msra.mxu0 0
        %2467 = vmatprep.subr.bf16.mxu0 0
        %2468 = vmatpush1.bf16.msra.mxu0 %v2451
        %2469 = vmatprep.subr.bf16.mxu0 0
        %2470 = vmatpush2.bf16.msra.mxu0 0
        %2471 = vmatprep.subr.bf16.mxu0 0
        %2472 = vmatpush2.bf16.msra.mxu0 0
        %2473 = vmatprep.subr.bf16.mxu0 0
        %2474 = vmatpush2.bf16.msra.mxu0 0
        %2475 = vmatprep.subr.bf16.mxu0 0
        %2476 = vmatpush2.bf16.msra.mxu0 0
        %2477 = vmatprep.subr.bf16.mxu0 0
        %2478 = vmatpush2.bf16.msra.mxu0 0
        %2479 = vmatprep.subr.bf16.mxu0 0
        %2480 = vmatpush2.bf16.msra.mxu0 0
        %2481 = vmatprep.subr.bf16.mxu0 0
        %2482 = vmatpush2.bf16.msra.mxu0 0
        %2483 = vmatprep.subr.bf16.mxu0 0
        %2484 = vmatpush2.bf16.msra.mxu0 0
        %2485 = vmatprep.mubr.bf16.mxu0 0
        %2486 = vmatmul.mubr.bf16.gmra.mxu0 %v643
        %v2487 = vpop.f32.mrf.mxu0
        %v2488 = vadd.f32 0.0, %v2487
        %v2489 = vpop.f32.mrf.mxu0
        %v2490 = vpop.f32.mrf.mxu0
        %v2491 = vadd.f32 0.0, %v2490
        %v2492 = vpop.f32.mrf.mxu0
        %2493 = vmatprep.mubr.bf16.mxu0 0
        %2494 = vmatmul.mubr.bf16.gmra.mxu0 %v646
        %v2495 = vpop.f32.mrf.mxu0
        %v2496 = vadd.f32 0.0, %v2495
        %v2497 = vpop.f32.mrf.mxu0
        %v2498 = vpop.f32.mrf.mxu0
        %v2499 = vadd.f32 0.0, %v2498
        %v2500 = vpop.f32.mrf.mxu0
        %2501 = vmatprep.mubr.bf16.mxu0 0
        %2502 = vmatmul.mubr.bf16.gmra.mxu0 %v649
        %v2503 = vpop.f32.mrf.mxu0
        %v2504 = vadd.f32 0.0, %v2503
        %v2505 = vpop.f32.mrf.mxu0
        %v2506 = vpop.f32.mrf.mxu0
        %v2507 = vadd.f32 0.0, %v2506
        %v2508 = vpop.f32.mrf.mxu0
        %2509 = vmatprep.mubr.bf16.mxu0 0
        %2510 = vmatmul.mubr.bf16.gmra.mxu0 %v652
        %v2511 = vpop.f32.mrf.mxu0
        %v2512 = vadd.f32 0.0, %v2511
        %v2513 = vpop.f32.mrf.mxu0
        %v2514 = vpop.f32.mrf.mxu0
        %v2515 = vadd.f32 0.0, %v2514
        %v2516 = vpop.f32.mrf.mxu0
        %2517 = vmatprep.mubr.bf16.mxu0 0
        %2518 = vmatmul.mubr.bf16.gmra.mxu0 %v655
        %v2519 = vpop.f32.mrf.mxu0
        %v2520 = vadd.f32 0.0, %v2519
        %v2521 = vpop.f32.mrf.mxu0
        %v2522 = vpop.f32.mrf.mxu0
        %v2523 = vadd.f32 0.0, %v2522
        %v2524 = vpop.f32.mrf.mxu0
        %2525 = vmatprep.mubr.bf16.mxu0 0
        %2526 = vmatmul.mubr.bf16.gmra.mxu0 %v658
        %v2527 = vpop.f32.mrf.mxu0
        %v2528 = vadd.f32 0.0, %v2527
        %v2529 = vpop.f32.mrf.mxu0
        %v2530 = vpop.f32.mrf.mxu0
        %v2531 = vadd.f32 0.0, %v2530
        %v2532 = vpop.f32.mrf.mxu0
        %2533 = vmatprep.mubr.bf16.mxu0 0
        %2534 = vmatmul.mubr.bf16.gmra.mxu0 %v661
        %v2535 = vpop.f32.mrf.mxu0
        %v2536 = vadd.f32 0.0, %v2535
        %v2537 = vpop.f32.mrf.mxu0
        %v2538 = vpop.f32.mrf.mxu0
        %v2539 = vadd.f32 0.0, %v2538
        %v2540 = vpop.f32.mrf.mxu0
        %2541 = vmatprep.mubr.bf16.mxu0 0
        %2542 = vmatmul.mubr.bf16.gmra.mxu0 %v664
        %v2543 = vpop.f32.mrf.mxu0
        %v2544 = vadd.f32 0.0, %v2543
        %v2545 = vpop.f32.mrf.mxu0
        %v2546 = vpop.f32.mrf.mxu0
        %v2547 = vadd.f32 0.0, %v2546
        %v2548 = vpop.f32.mrf.mxu0
        %2549 = vmatprep.mubr.bf16.mxu0 0
        %2550 = vmatmul.mubr.bf16.gmra.mxu0 %v667
        %v2551 = vpop.f32.mrf.mxu0
        %v2552 = vadd.f32 0.0, %v2551
        %v2553 = vpop.f32.mrf.mxu0
        %v2554 = vpop.f32.mrf.mxu0
        %v2555 = vadd.f32 0.0, %v2554
        %v2556 = vpop.f32.mrf.mxu0
        %2557 = vmatprep.mubr.bf16.mxu0 0
        %2558 = vmatmul.mubr.bf16.gmra.mxu0 %v670
        %v2559 = vpop.f32.mrf.mxu0
        %v2560 = vadd.f32 0.0, %v2559
        %v2561 = vpop.f32.mrf.mxu0
        %v2562 = vpop.f32.mrf.mxu0
        %v2563 = vadd.f32 0.0, %v2562
        %v2564 = vpop.f32.mrf.mxu0
        %2565 = vmatprep.mubr.bf16.mxu0 0
        %2566 = vmatmul.mubr.bf16.gmra.mxu0 %v673
        %v2567 = vpop.f32.mrf.mxu0
        %v2568 = vadd.f32 0.0, %v2567
        %v2569 = vpop.f32.mrf.mxu0
        %v2570 = vpop.f32.mrf.mxu0
        %v2571 = vadd.f32 0.0, %v2570
        %v2572 = vpop.f32.mrf.mxu0
        %2573 = vmatprep.mubr.bf16.mxu0 0
        %2574 = vmatmul.mubr.bf16.gmra.mxu0 %v676
        %v2575 = vpop.f32.mrf.mxu0
        %v2576 = vadd.f32 0.0, %v2575
        %v2577 = vpop.f32.mrf.mxu0
        %v2578 = vpop.f32.mrf.mxu0
        %v2579 = vadd.f32 0.0, %v2578
        %v2580 = vpop.f32.mrf.mxu0
        %2581 = vmatprep.mubr.bf16.mxu0 0
        %2582 = vmatmul.mubr.bf16.gmra.mxu0 %v679
        %v2583 = vpop.f32.mrf.mxu0
        %v2584 = vadd.f32 0.0, %v2583
        %v2585 = vpop.f32.mrf.mxu0
        %v2586 = vpop.f32.mrf.mxu0
        %v2587 = vadd.f32 0.0, %v2586
        %v2588 = vpop.f32.mrf.mxu0
        %2589 = vmatprep.mubr.bf16.mxu0 0
        %2590 = vmatmul.mubr.bf16.gmra.mxu0 %v682
        %v2591 = vpop.f32.mrf.mxu0
        %v2592 = vadd.f32 0.0, %v2591
        %v2593 = vpop.f32.mrf.mxu0
        %v2594 = vpop.f32.mrf.mxu0
        %v2595 = vadd.f32 0.0, %v2594
        %v2596 = vpop.f32.mrf.mxu0
        %2597 = vmatprep.mubr.bf16.mxu0 0
        %2598 = vmatmul.mubr.bf16.gmra.mxu0 %v1802
        %v2599 = vpop.f32.mrf.mxu0
        %v2600 = vadd.f32 0.0, %v2599
        %v2601 = vpop.f32.mrf.mxu0
        %v2602 = vpop.f32.mrf.mxu0
        %v2603 = vadd.f32 0.0, %v2602
        %v2604 = vpop.f32.mrf.mxu0
        %2605 = vmatprep.mubr.bf16.mxu0 0
        %2606 = vmatmul.mubr.bf16.gmra.mxu0 %v2448
        %v2607 = vpop.f32.mrf.mxu0
        %v2608 = vadd.f32 0.0, %v2607
        %v2609 = vpop.f32.mrf.mxu0
        %v2610 = vpop.f32.mrf.mxu0
        %v2611 = vadd.f32 0.0, %v2610
        %v2612 = vpop.f32.mrf.mxu0
        %2613 = vdwg.mxu0
        %v2614 = vadd.f32 %v2386, %v2488
        %v2615 = vadd.f32 %v2387, %v2491
        %v2616 = vadd.f32 %v2388, %v2496
        %v2617 = vadd.f32 %v2389, %v2499
        %v2618 = vadd.f32 %v2390, %v2504
        %v2619 = vadd.f32 %v2391, %v2507
        %v2620 = vadd.f32 %v2392, %v2512
        %v2621 = vadd.f32 %v2393, %v2515
        %v2622 = vadd.f32 %v2394, %v2520
        %v2623 = vadd.f32 %v2395, %v2523
        %v2624 = vadd.f32 %v2396, %v2528
        %v2625 = vadd.f32 %v2397, %v2531
        %v2626 = vadd.f32 %v2398, %v2536
        %v2627 = vadd.f32 %v2399, %v2539
        %v2628 = vadd.f32 %v2400, %v2544
        %v2629 = vadd.f32 %v2401, %v2547
        %v2630 = vadd.f32 %v2402, %v2552
        %v2631 = vadd.f32 %v2403, %v2555
        %v2632 = vadd.f32 %v2404, %v2560
        %v2633 = vadd.f32 %v2405, %v2563
        %v2634 = vadd.f32 %v2406, %v2568
        %v2635 = vadd.f32 %v2407, %v2571
        %v2636 = vadd.f32 %v2408, %v2576
        %v2637 = vadd.f32 %v2409, %v2579
        %v2638 = vadd.f32 %v2410, %v2584
        %v2639 = vadd.f32 %v2411, %v2587
        %v2640 = vadd.f32 %v2412, %v2592
        %v2641 = vadd.f32 %v2413, %v2595
        %v2642 = vadd.f32 %v2414, %v2600
        %v2643 = vadd.f32 %v2415, %v2603
        %v2644 = vadd.f32 %v2416, %v2608
        %v2645 = vadd.f32 %v2417, %v2611
        %v2647 = vrot.slane %v194, 5
        %v2648 = vrot.slane %v2647, 4
        %v2649 = vrot.slane %v195, 5
        %v2650 = vsel %vm1159, %v2648, %v2649
        %v2651 = vrot.slane %v2649, 4
        %v2652 = vrot.slane %v196, 5
        %v2653 = vsel %vm1159, %v2651, %v2652
        %s2654 = scalar_lea.vmem %s1, 16
        %v2655 = vld [vmem:[%s2654] sm:$0x3]
        %v2656 = vunpack.c.l.b16 %v2650
        %v2657 = vunpack.c.l.b16 %v2653
        %v2658 = vpack.c.b16 %v2657, %v2656
        %v2660 = vsel %vm635, %v2658, 0
        %v2663 = vsel %vm684, %v2655, 0
        %2665 = vmatprep.subr.bf16.mxu0 0
        %2666 = vmatpush1.bf16.msra.mxu0 0
        %2667 = vmatprep.subr.bf16.mxu0 0
        %2668 = vmatpush1.bf16.msra.mxu0 0
        %2669 = vmatprep.subr.bf16.mxu0 0
        %2670 = vmatpush1.bf16.msra.mxu0 0
        %2671 = vmatprep.subr.bf16.mxu0 0
        %2672 = vmatpush1.bf16.msra.mxu0 0
        %2673 = vmatprep.subr.bf16.mxu0 0
        %2674 = vmatpush1.bf16.msra.mxu0 0
        %2675 = vmatprep.subr.bf16.mxu0 0
        %2676 = vmatpush1.bf16.msra.mxu0 0
        %2677 = vmatprep.subr.bf16.mxu0 0
        %2678 = vmatpush1.bf16.msra.mxu0 0
        %2679 = vmatprep.subr.bf16.mxu0 0
        %2680 = vmatpush1.bf16.msra.mxu0 %v2663
        %2681 = vmatprep.subr.bf16.mxu0 0
        %2682 = vmatpush2.bf16.msra.mxu0 0
        %2683 = vmatprep.subr.bf16.mxu0 0
        %2684 = vmatpush2.bf16.msra.mxu0 0
        %2685 = vmatprep.subr.bf16.mxu0 0
        %2686 = vmatpush2.bf16.msra.mxu0 0
        %2687 = vmatprep.subr.bf16.mxu0 0
        %2688 = vmatpush2.bf16.msra.mxu0 0
        %2689 = vmatprep.subr.bf16.mxu0 0
        %2690 = vmatpush2.bf16.msra.mxu0 0
        %2691 = vmatprep.subr.bf16.mxu0 0
        %2692 = vmatpush2.bf16.msra.mxu0 0
        %2693 = vmatprep.subr.bf16.mxu0 0
        %2694 = vmatpush2.bf16.msra.mxu0 0
        %2695 = vmatprep.subr.bf16.mxu0 0
        %2696 = vmatpush2.bf16.msra.mxu0 0
        %2697 = vmatprep.mubr.bf16.mxu0 0
        %2698 = vmatmul.mubr.bf16.gmra.mxu0 %v1329
        %v2699 = vpop.f32.mrf.mxu0
        %v2700 = vadd.f32 0.0, %v2699
        %v2701 = vpop.f32.mrf.mxu0
        %v2702 = vpop.f32.mrf.mxu0
        %v2703 = vadd.f32 0.0, %v2702
        %v2704 = vpop.f32.mrf.mxu0
        %2705 = vmatprep.mubr.bf16.mxu0 0
        %2706 = vmatmul.mubr.bf16.gmra.mxu0 %v1332
        %v2707 = vpop.f32.mrf.mxu0
        %v2708 = vadd.f32 0.0, %v2707
        %v2709 = vpop.f32.mrf.mxu0
        %v2710 = vpop.f32.mrf.mxu0
        %v2711 = vadd.f32 0.0, %v2710
        %v2712 = vpop.f32.mrf.mxu0
        %2713 = vmatprep.mubr.bf16.mxu0 0
        %2714 = vmatmul.mubr.bf16.gmra.mxu0 %v1335
        %v2715 = vpop.f32.mrf.mxu0
        %v2716 = vadd.f32 0.0, %v2715
        %v2717 = vpop.f32.mrf.mxu0
        %v2718 = vpop.f32.mrf.mxu0
        %v2719 = vadd.f32 0.0, %v2718
        %v2720 = vpop.f32.mrf.mxu0
        %2721 = vmatprep.mubr.bf16.mxu0 0
        %2722 = vmatmul.mubr.bf16.gmra.mxu0 %v1338
        %v2723 = vpop.f32.mrf.mxu0
        %v2724 = vadd.f32 0.0, %v2723
        %v2725 = vpop.f32.mrf.mxu0
        %v2726 = vpop.f32.mrf.mxu0
        %v2727 = vadd.f32 0.0, %v2726
        %v2728 = vpop.f32.mrf.mxu0
        %2729 = vmatprep.mubr.bf16.mxu0 0
        %2730 = vmatmul.mubr.bf16.gmra.mxu0 %v1341
        %v2731 = vpop.f32.mrf.mxu0
        %v2732 = vadd.f32 0.0, %v2731
        %v2733 = vpop.f32.mrf.mxu0
        %v2734 = vpop.f32.mrf.mxu0
        %v2735 = vadd.f32 0.0, %v2734
        %v2736 = vpop.f32.mrf.mxu0
        %2737 = vmatprep.mubr.bf16.mxu0 0
        %2738 = vmatmul.mubr.bf16.gmra.mxu0 %v1344
        %v2739 = vpop.f32.mrf.mxu0
        %v2740 = vadd.f32 0.0, %v2739
        %v2741 = vpop.f32.mrf.mxu0
        %v2742 = vpop.f32.mrf.mxu0
        %v2743 = vadd.f32 0.0, %v2742
        %v2744 = vpop.f32.mrf.mxu0
        %2745 = vmatprep.mubr.bf16.mxu0 0
        %2746 = vmatmul.mubr.bf16.gmra.mxu0 %v1347
        %v2747 = vpop.f32.mrf.mxu0
        %v2748 = vadd.f32 0.0, %v2747
        %v2749 = vpop.f32.mrf.mxu0
        %v2750 = vpop.f32.mrf.mxu0
        %v2751 = vadd.f32 0.0, %v2750
        %v2752 = vpop.f32.mrf.mxu0
        %2753 = vmatprep.mubr.bf16.mxu0 0
        %2754 = vmatmul.mubr.bf16.gmra.mxu0 %v1350
        %v2755 = vpop.f32.mrf.mxu0
        %v2756 = vadd.f32 0.0, %v2755
        %v2757 = vpop.f32.mrf.mxu0
        %v2758 = vpop.f32.mrf.mxu0
        %v2759 = vadd.f32 0.0, %v2758
        %v2760 = vpop.f32.mrf.mxu0
        %2761 = vmatprep.mubr.bf16.mxu0 0
        %2762 = vmatmul.mubr.bf16.gmra.mxu0 %v1353
        %v2763 = vpop.f32.mrf.mxu0
        %v2764 = vadd.f32 0.0, %v2763
        %v2765 = vpop.f32.mrf.mxu0
        %v2766 = vpop.f32.mrf.mxu0
        %v2767 = vadd.f32 0.0, %v2766
        %v2768 = vpop.f32.mrf.mxu0
        %2769 = vmatprep.mubr.bf16.mxu0 0
        %2770 = vmatmul.mubr.bf16.gmra.mxu0 %v1356
        %v2771 = vpop.f32.mrf.mxu0
        %v2772 = vadd.f32 0.0, %v2771
        %v2773 = vpop.f32.mrf.mxu0
        %v2774 = vpop.f32.mrf.mxu0
        %v2775 = vadd.f32 0.0, %v2774
        %v2776 = vpop.f32.mrf.mxu0
        %2777 = vmatprep.mubr.bf16.mxu0 0
        %2778 = vmatmul.mubr.bf16.gmra.mxu0 %v1359
        %v2779 = vpop.f32.mrf.mxu0
        %v2780 = vadd.f32 0.0, %v2779
        %v2781 = vpop.f32.mrf.mxu0
        %v2782 = vpop.f32.mrf.mxu0
        %v2783 = vadd.f32 0.0, %v2782
        %v2784 = vpop.f32.mrf.mxu0
        %2785 = vmatprep.mubr.bf16.mxu0 0
        %2786 = vmatmul.mubr.bf16.gmra.mxu0 %v1362
        %v2787 = vpop.f32.mrf.mxu0
        %v2788 = vadd.f32 0.0, %v2787
        %v2789 = vpop.f32.mrf.mxu0
        %v2790 = vpop.f32.mrf.mxu0
        %v2791 = vadd.f32 0.0, %v2790
        %v2792 = vpop.f32.mrf.mxu0
        %2793 = vmatprep.mubr.bf16.mxu0 0
        %2794 = vmatmul.mubr.bf16.gmra.mxu0 %v1365
        %v2795 = vpop.f32.mrf.mxu0
        %v2796 = vadd.f32 0.0, %v2795
        %v2797 = vpop.f32.mrf.mxu0
        %v2798 = vpop.f32.mrf.mxu0
        %v2799 = vadd.f32 0.0, %v2798
        %v2800 = vpop.f32.mrf.mxu0
        %2801 = vmatprep.mubr.bf16.mxu0 0
        %2802 = vmatmul.mubr.bf16.gmra.mxu0 %v1368
        %v2803 = vpop.f32.mrf.mxu0
        %v2804 = vadd.f32 0.0, %v2803
        %v2805 = vpop.f32.mrf.mxu0
        %v2806 = vpop.f32.mrf.mxu0
        %v2807 = vadd.f32 0.0, %v2806
        %v2808 = vpop.f32.mrf.mxu0
        %2809 = vmatprep.mubr.bf16.mxu0 0
        %2810 = vmatmul.mubr.bf16.gmra.mxu0 %v2014
        %v2811 = vpop.f32.mrf.mxu0
        %v2812 = vadd.f32 0.0, %v2811
        %v2813 = vpop.f32.mrf.mxu0
        %v2814 = vpop.f32.mrf.mxu0
        %v2815 = vadd.f32 0.0, %v2814
        %v2816 = vpop.f32.mrf.mxu0
        %2817 = vmatprep.mubr.bf16.mxu0 0
        %2818 = vmatmul.mubr.bf16.gmra.mxu0 %v2660
        %v2819 = vpop.f32.mrf.mxu0
        %v2820 = vadd.f32 0.0, %v2819
        %v2821 = vpop.f32.mrf.mxu0
        %v2822 = vpop.f32.mrf.mxu0
        %v2823 = vadd.f32 0.0, %v2822
        %v2824 = vpop.f32.mrf.mxu0
        %2825 = vdwg.mxu0
        %v2826 = vadd.f32 %v2614, %v2700
        %v2827 = vadd.f32 %v2615, %v2703
        %v2828 = vadd.f32 %v2616, %v2708
        %v2829 = vadd.f32 %v2617, %v2711
        %v2830 = vadd.f32 %v2618, %v2716
        %v2831 = vadd.f32 %v2619, %v2719
        %v2832 = vadd.f32 %v2620, %v2724
        %v2833 = vadd.f32 %v2621, %v2727
        %v2834 = vadd.f32 %v2622, %v2732
        %v2835 = vadd.f32 %v2623, %v2735
        %v2836 = vadd.f32 %v2624, %v2740
        %v2837 = vadd.f32 %v2625, %v2743
        %v2838 = vadd.f32 %v2626, %v2748
        %v2839 = vadd.f32 %v2627, %v2751
        %v2840 = vadd.f32 %v2628, %v2756
        %v2841 = vadd.f32 %v2629, %v2759
        %v2842 = vadd.f32 %v2630, %v2764
        %v2843 = vadd.f32 %v2631, %v2767
        %v2844 = vadd.f32 %v2632, %v2772
        %v2845 = vadd.f32 %v2633, %v2775
        %v2846 = vadd.f32 %v2634, %v2780
        %v2847 = vadd.f32 %v2635, %v2783
        %v2848 = vadd.f32 %v2636, %v2788
        %v2849 = vadd.f32 %v2637, %v2791
        %v2850 = vadd.f32 %v2638, %v2796
        %v2851 = vadd.f32 %v2639, %v2799
        %v2852 = vadd.f32 %v2640, %v2804
        %v2853 = vadd.f32 %v2641, %v2807
        %v2854 = vadd.f32 %v2642, %v2812
        %v2855 = vadd.f32 %v2643, %v2815
        %v2856 = vadd.f32 %v2644, %v2820
        %v2857 = vadd.f32 %v2645, %v2823
        %v2858 = vadd.f32 %v2826, %v2827
        %v2859 = vadd.f32 %v2858, %v2828
        %v2860 = vadd.f32 %v2859, %v2829
        %v2861 = vadd.f32 %v2860, %v2830
        %v2862 = vadd.f32 %v2861, %v2831
        %v2863 = vadd.f32 %v2862, %v2832
        %v2864 = vadd.f32 %v2863, %v2833
        %v2865 = vadd.f32 %v2864, %v2834
        %v2866 = vadd.f32 %v2865, %v2835
        %v2867 = vadd.f32 %v2866, %v2836
        %v2868 = vadd.f32 %v2867, %v2837
        %v2869 = vadd.f32 %v2868, %v2838
        %v2870 = vadd.f32 %v2869, %v2839
        %v2871 = vadd.f32 %v2870, %v2840
        %v2872 = vadd.f32 %v2871, %v2841
        %v2873 = vadd.f32 %v2872, %v2842
        %v2874 = vadd.f32 %v2873, %v2843
        %v2875 = vadd.f32 %v2874, %v2844
        %v2876 = vadd.f32 %v2875, %v2845
        %v2877 = vadd.f32 %v2876, %v2846
        %v2878 = vadd.f32 %v2877, %v2847
        %v2879 = vadd.f32 %v2878, %v2848
        %v2880 = vadd.f32 %v2879, %v2849
        %v2881 = vadd.f32 %v2880, %v2850
        %v2882 = vadd.f32 %v2881, %v2851
        %v2883 = vadd.f32 %v2882, %v2852
        %v2884 = vadd.f32 %v2883, %v2853
        %v2885 = vadd.f32 %v2884, %v2854
        %v2886 = vadd.f32 %v2885, %v2855
        %v2887 = vadd.f32 %v2886, %v2856
        %v2888 = vadd.f32 %v2887, %v2857
        %v2889 = vrot.slane %v2888, 4
        %v2890 = vadd.f32 %v2888, %v2889
        %v2891 = vrot.slane %v2890, 2
        %v2892 = vadd.f32 %v2890, %v2891
        %v2893 = vrot.slane %v2892, 1
        %v2894 = vadd.f32 %v2892, %v2893
        %v2895 = vmul.f32 %v2826, %v2826
        %v2896 = vmul.f32 %v2827, %v2827
        %v2897 = vmul.f32 %v2828, %v2828
        %v2898 = vmul.f32 %v2829, %v2829
        %v2899 = vmul.f32 %v2830, %v2830
        %v2900 = vmul.f32 %v2831, %v2831
        %v2901 = vmul.f32 %v2832, %v2832
        %v2902 = vmul.f32 %v2833, %v2833
        %v2903 = vmul.f32 %v2834, %v2834
        %v2904 = vmul.f32 %v2835, %v2835
        %v2905 = vmul.f32 %v2836, %v2836
        %v2906 = vmul.f32 %v2837, %v2837
        %v2907 = vmul.f32 %v2838, %v2838
        %v2908 = vmul.f32 %v2839, %v2839
        %v2909 = vmul.f32 %v2840, %v2840
        %v2910 = vmul.f32 %v2841, %v2841
        %v2911 = vmul.f32 %v2842, %v2842
        %v2912 = vmul.f32 %v2843, %v2843
        %v2913 = vmul.f32 %v2844, %v2844
        %v2914 = vmul.f32 %v2845, %v2845
        %v2915 = vmul.f32 %v2846, %v2846
        %v2916 = vmul.f32 %v2847, %v2847
        %v2917 = vmul.f32 %v2848, %v2848
        %v2918 = vmul.f32 %v2849, %v2849
        %v2919 = vmul.f32 %v2850, %v2850
        %v2920 = vmul.f32 %v2851, %v2851
        %v2921 = vmul.f32 %v2852, %v2852
        %v2922 = vmul.f32 %v2853, %v2853
        %v2923 = vmul.f32 %v2854, %v2854
        %v2924 = vmul.f32 %v2855, %v2855
        %v2925 = vmul.f32 %v2856, %v2856
        %v2926 = vmul.f32 %v2857, %v2857
        %v2927 = vadd.f32 %v2895, %v2896
        %v2928 = vadd.f32 %v2927, %v2897
        %v2929 = vadd.f32 %v2928, %v2898
        %v2930 = vadd.f32 %v2929, %v2899
        %v2931 = vadd.f32 %v2930, %v2900
        %v2932 = vadd.f32 %v2931, %v2901
        %v2933 = vadd.f32 %v2932, %v2902
        %v2934 = vadd.f32 %v2933, %v2903
        %v2935 = vadd.f32 %v2934, %v2904
        %v2936 = vadd.f32 %v2935, %v2905
        %v2937 = vadd.f32 %v2936, %v2906
        %v2938 = vadd.f32 %v2937, %v2907
        %v2939 = vadd.f32 %v2938, %v2908
        %v2940 = vadd.f32 %v2939, %v2909
        %v2941 = vadd.f32 %v2940, %v2910
        %v2942 = vadd.f32 %v2941, %v2911
        %v2943 = vadd.f32 %v2942, %v2912
        %v2944 = vadd.f32 %v2943, %v2913
        %v2945 = vadd.f32 %v2944, %v2914
        %v2946 = vadd.f32 %v2945, %v2915
        %v2947 = vadd.f32 %v2946, %v2916
        %v2948 = vadd.f32 %v2947, %v2917
        %v2949 = vadd.f32 %v2948, %v2918
        %v2950 = vadd.f32 %v2949, %v2919
        %v2951 = vadd.f32 %v2950, %v2920
        %v2952 = vadd.f32 %v2951, %v2921
        %v2953 = vadd.f32 %v2952, %v2922
        %v2954 = vadd.f32 %v2953, %v2923
        %v2955 = vadd.f32 %v2954, %v2924
        %v2956 = vadd.f32 %v2955, %v2925
        %v2957 = vadd.f32 %v2956, %v2926
        %v2958 = vrot.slane %v2957, 4
        %v2959 = vadd.f32 %v2957, %v2958
        %v2960 = vrot.slane %v2959, 2
        %v2961 = vadd.f32 %v2959, %v2960
        %v2962 = vrot.slane %v2961, 1
        %v2963 = vadd.f32 %v2961, %v2962
        %vm2964 = vcmask 1040384
        %v2965 = vsel %vm2964, %v2894, %v2963
        %v2966 = vsel %vm684, %v2965, 0.0
        %2967 = vst [vmem:[%s136] sm:$0xff] %v2966
        %s2968 = sand.u32 %s71, 1
        %s2969 = scalar_lea.sflag [#allocation3], %s2968
        %s2970 = sand.u32 %s71, 1
        %s2971 = smul.addr %s2970, 8
        %s2972 = scalar_lea.vmem [#allocation2], %s2971
        // Predicated region
        $region29: #{tpu_custom_call.1} parent=27 // pred_check
          %p2973 = pneg %p81
        $region30: #{tpu_custom_call.1} parent=27 // pred_check_branch
          %2975 = sbr.rel (%p2973) target = $region32
        $region31: #{tpu_custom_call.1} parent=27 // pred_region
          %s2977 = ssub.s32 128, 128
          %2978 = vsyncadd %s2969, %s2977
          %s2979 = smul.addr %s16, 128
          %s2980 = scalar_lea.hbm %s2, %s2979
          %s2982 = sshll.u32 %s2972, 4
          %s2983 = int_to_ptr.vmem [resolvable:$true] %s2982
          %2985 = dma.vmem_to_hbm [thread:$0]  %s2983, 128, %s2980, %s2969
        $region32: #{tpu_custom_call.1} parent=27 // pred_fallthru
          _
      $region28: #{tpu_custom_call.1} parent=5 // pred_fallthru
        _
      %p2986 = scmp.le.s32.totalorder 2, %s11
      // Predicated region
      $region33: #{tpu_custom_call.1} parent=5 // pred_check
        %p2987 = pneg %p2986
      $region34: #{tpu_custom_call.1} parent=5 // pred_check_branch
        %2989 = sbr.rel (%p2987) target = $region36
      $region35: #{tpu_custom_call.1} parent=5 // pred_region
        %s2990 = ssub.s32 %s11, 2
        // Predicated region
        $region37: #{tpu_custom_call.1} parent=35 // pred_check
          %p2991 = pneg %p87
        $region38: #{tpu_custom_call.1} parent=35 // pred_check_branch
          %2993 = sbr.rel (%p2991) target = $region40
        $region39: #{tpu_custom_call.1} parent=35 // pred_region
          %s2994 = sand.u32 %s72, 1
          %s2995 = scalar_lea.sflag [#allocation3], %s2994
          %s2996 = sand.u32 %s72, 1
          %s2997 = smul.addr %s2996, 8
          %s2998 = scalar_lea.vmem [#allocation2], %s2997
          %2999 = dma.done %s2995, 128
        $region40: #{tpu_custom_call.1} parent=35 // pred_fallthru
          _
      $region36: #{tpu_custom_call.1} parent=5 // pred_fallthru
        _
    $region6: #{tpu_custom_call.1} parent=1 // loop_footer
      %s15 = sadd.s32 1, %s11
    $region7: #{tpu_custom_call.1} parent=1 // loop_footer_branch
      %10 = sbr.rel target = $region3
    $region8: #{tpu_custom_call.1} parent=1 // loop_exit
      _
    %3000 = vsyncpa [#allocation3], 1
    %s3001 = scalar_lea.sflag [#allocation3], 1
    %3002 = vsyncpa %s3001, 1

</llo_original>
